<compile_context>
chip_gen: v7x
topology: tpu7x:2x2x1
jax: 0.10.0
libtpu: 0.0.40
codegen_flags: <defaults>
</compile_context>

<pallas_src>
import numpy as np
import jax
import jax.numpy as jnp
from jax.experimental import pallas as pl
from jax.experimental.pallas import tpu as pltpu

EPS = 1e-5


def gen_rot_kernel(x_ref,
                   w1_ref, g1_ref, be1_ref,
                   w2_ref, g2_ref, be2_ref,
                   w3_ref, b3_ref,
                   out_ref):
    inv_b = 1.0 / x_ref.shape[0]

    # ---- fc1 (bf16 MXU) + BatchNorm1d (training-mode batch stats) + ReLU ----
    # fc1 bias omitted: bias before training-mode BN cancels exactly.
    h1 = jnp.dot(x_ref[...].astype(jnp.bfloat16), w1_ref[...],
                 preferred_element_type=jnp.float32)
    mu1 = jnp.sum(h1, axis=0, keepdims=True) * inv_b
    ex2_1 = jnp.sum(h1 * h1, axis=0, keepdims=True) * inv_b
    var1 = ex2_1 - mu1 * mu1
    scale1 = g1_ref[...] * jax.lax.rsqrt(var1 + EPS)      # (1, 512) row math
    shift1 = be1_ref[...] - mu1 * scale1
    h1 = jnp.maximum(h1 * scale1 + shift1, 0.0)

    # ---- fc2 (bf16 MXU) + BatchNorm1d + ReLU ----
    h2 = jnp.dot(h1.astype(jnp.bfloat16), w2_ref[...],
                 preferred_element_type=jnp.float32)
    mu2 = jnp.sum(h2, axis=0, keepdims=True) * inv_b
    ex2_2 = jnp.sum(h2 * h2, axis=0, keepdims=True) * inv_b
    var2 = ex2_2 - mu2 * mu2
    scale2 = g2_ref[...] * jax.lax.rsqrt(var2 + EPS)      # (1, 256) row math
    shift2 = be2_ref[...] - mu2 * scale2
    h2 = jnp.maximum(h2 * scale2 + shift2, 0.0)

    # ---- fc3 (tiny, f32) -> quaternion, add identity quaternion [1,0,0,0] ----
    q = jnp.dot(h2, w3_ref[...], preferred_element_type=jnp.float32) + b3_ref[...]
    q0 = q[:, 0:1] + 1.0
    q1 = q[:, 1:2]
    q2 = q[:, 2:3]
    q3 = q[:, 3:4]

    # batch_quat_to_rotmat
    qlen = q0 * q0 + q1 * q1 + q2 * q2 + q3 * q3
    s = 2.0 * pl.reciprocal(qlen, approx=True)            # EUP vrcp

    r = jnp.concatenate([
        1.0 - (q2 * q2 + q3 * q3) * s,   # r00
        (q1 * q2 - q3 * q0) * s,         # r01
        (q1 * q3 + q2 * q0) * s,         # r02
        (q1 * q2 + q3 * q0) * s,         # r10
        1.0 - (q1 * q1 + q3 * q3) * s,   # r11
        (q2 * q3 - q1 * q0) * s,         # r12
        (q1 * q3 - q2 * q0) * s,         # r20
        (q2 * q3 + q1 * q0) * s,         # r21
        1.0 - (q1 * q1 + q2 * q2) * s,   # r22
    ], axis=1)
    out_ref[...] = r                                       # single (B, 9) store


def generator_rotation_forward(x, params):
    """x: (B, dim+1024) float32.  Returns ((B, 3, 3) rotation matrices, None)."""
    B = x.shape[0]
    args = (x,
            params["w1"], params["g1"], params["be1"],
            params["w2"], params["g2"], params["be2"],
            params["w3"], params["b3"])

    vmem_spec = pl.BlockSpec(memory_space=pltpu.MemorySpace.VMEM)
    rot_flat = pl.pallas_call(
        gen_rot_kernel,
        out_shape=jax.ShapeDtypeStruct((B, 9), jnp.float32),
        in_specs=[vmem_spec] * len(args),
        out_specs=vmem_spec,
    )(*args)

    return rot_flat.reshape(B, 3, 3), None


def init_params(dim, key):
    """Deterministic parameter init mimicking PyTorch Linear default ranges.

    w1 / w2 are stored bf16 (dominant HBM bytes); everything else f32.
    b1 / b2 are kept only for the pure-JAX reference -- they are mathematically
    cancelled by the training-mode BatchNorm and are never sent to the kernel.
    """
    ks = jax.random.split(key, 3)
    d_in = dim + 1024

    def lin(k, fan_in, fan_out):
        kw, kb = jax.random.split(k)
        bound = 1.0 / np.sqrt(fan_in)
        w = jax.random.uniform(kw, (fan_in, fan_out), jnp.float32, -bound, bound)
        b = jax.random.uniform(kb, (1, fan_out), jnp.float32, -bound, bound)
        return w, b

    w1, b1 = lin(ks[0], d_in, 512)
    w2, b2 = lin(ks[1], 512, 256)
    w3, b3 = lin(ks[2], 256, 4)
    return {
        "w1": w1.astype(jnp.bfloat16), "b1": b1,
        "g1": jnp.ones((1, 512), jnp.float32), "be1": jnp.zeros((1, 512), jnp.float32),
        "w2": w2.astype(jnp.bfloat16), "b2": b2,
        "g2": jnp.ones((1, 256), jnp.float32), "be2": jnp.zeros((1, 256), jnp.float32),
        "w3": w3, "b3": b3,
    }


def ref_forward(x, p):
    """Pure-JAX reference of the PyTorch forward (training-mode BN).

    Faithful to the module: fc1/fc2 biases ARE applied here (BN cancels them),
    BN is the classic (h - mu) / sqrt(var + eps) form, and 2/|q|^2 is exact.
    Activations are rounded to bf16 before fc1/fc2, matching the kernel's
    bf16 weight storage.
    """
    def bn(h, g, be):
        mu = jnp.mean(h, axis=0, keepdims=True)
        var = jnp.mean((h - mu) ** 2, axis=0, keepdims=True)
        return (h - mu) / jnp.sqrt(var + EPS) * g + be

    h = jnp.dot(x.astype(jnp.bfloat16), p["w1"],
                preferred_element_type=jnp.float32) + p["b1"]
    h = jax.nn.relu(bn(h, p["g1"], p["be1"]))
    h = jnp.dot(h.astype(jnp.bfloat16), p["w2"],
                preferred_element_type=jnp.float32) + p["b2"]
    h = jax.nn.relu(bn(h, p["g2"], p["be2"]))
    q = jnp.dot(h, p["w3"], preferred_element_type=jnp.float32) + p["b3"]
    q = q + jnp.array([1.0, 0.0, 0.0, 0.0], jnp.float32)

    q0, q1, q2, q3 = q[:, 0], q[:, 1], q[:, 2], q[:, 3]
    s = 2.0 / jnp.sum(q * q, axis=1)
    rot = jnp.stack([
        1 - (q2 * q2 + q3 * q3) * s, (q1 * q2 - q3 * q0) * s, (q1 * q3 + q2 * q0) * s,
        (q1 * q2 + q3 * q0) * s, 1 - (q1 * q1 + q3 * q3) * s, (q2 * q3 - q1 * q0) * s,
        (q1 * q3 - q2 * q0) * s, (q2 * q3 + q1 * q0) * s, 1 - (q1 * q1 + q2 * q2) * s,
    ], axis=1)
    return rot.reshape(-1, 3, 3)


if __name__ == "__main__":
    dim = 32
    B = 8
    key = jax.random.PRNGKey(0)
    kx, kp = jax.random.split(key)

    x = jax.random.normal(kx, (B, dim + 1024), jnp.float32)
    params = init_params(dim, kp)

    rot, none_out = generator_rotation_forward(x, params)
    rot = jax.block_until_ready(rot)

    rot_ref = ref_forward(x, params)
    assert rot.shape == (B, 3, 3)
    assert none_out is None
    # Tolerance covers bf16 weight storage + approx reciprocal (few e-4 abs).
    np.testing.assert_allclose(np.asarray(rot), np.asarray(rot_ref),
                               rtol=5e-3, atol=5e-3)
    print("KERNEL_OK")
</pallas_src>

<mosaic_0001>
module attributes {stable_mosaic.version = 11 : i64} {
  func.func @gen_rot_kernel(%arg0: memref<8x1056xf32, #tpu.memory_space<vmem>>, %arg1: memref<1056x512xbf16, #tpu.memory_space<vmem>>, %arg2: memref<1x512xf32, #tpu.memory_space<vmem>>, %arg3: memref<1x512xf32, #tpu.memory_space<vmem>>, %arg4: memref<512x256xbf16, #tpu.memory_space<vmem>>, %arg5: memref<1x256xf32, #tpu.memory_space<vmem>>, %arg6: memref<1x256xf32, #tpu.memory_space<vmem>>, %arg7: memref<256x4xf32, #tpu.memory_space<vmem>>, %arg8: memref<1x4xf32, #tpu.memory_space<vmem>>, %arg9: memref<8x9xf32, #tpu.memory_space<vmem>>) attributes {dimension_semantics = [], scalar_prefetch = 0 : i64, scratch_operands = 0 : i64, tpu.core_type = #tpu.core_type<tc>} {
    %c0 = arith.constant 0 : index
    %c0_0 = arith.constant 0 : index
    %0 = vector.load %arg0[%c0, %c0_0] : memref<8x1056xf32, #tpu.memory_space<vmem>>, vector<8x1056xf32>
    %1 = arith.truncf %0 : vector<8x1056xf32> to vector<8x1056xbf16>
    %c0_1 = arith.constant 0 : index
    %c0_2 = arith.constant 0 : index
    %2 = vector.load %arg1[%c0_1, %c0_2] : memref<1056x512xbf16, #tpu.memory_space<vmem>>, vector<1056x512xbf16>
    %cst = arith.constant dense<0.000000e+00> : vector<8x512xf32>
    %3 = tpu.matmul %1, %2, %cst {dimension_numbers = #tpu.dot_dimension_numbers<[1], [0], [0], [1], [0, 0, 1, 1], [], []>} : vector<8x1056xbf16>, vector<1056x512xbf16>, vector<8x512xf32> -> vector<8x512xf32>
    %cst_3 = arith.constant dense<0.000000e+00> : vector<512xf32>
    %4 = vector.multi_reduction <add>, %3, %cst_3 [0] : vector<8x512xf32> to vector<512xf32>
    %5 = vector.shape_cast %4 : vector<512xf32> to vector<1x512xf32>
    %cst_4 = arith.constant 1.250000e-01 : f32
    %6 = vector.broadcast %cst_4 : f32 to vector<1x512xf32>
    %7 = arith.mulf %5, %6 : vector<1x512xf32>
    %8 = arith.mulf %3, %3 : vector<8x512xf32>
    %cst_5 = arith.constant dense<0.000000e+00> : vector<512xf32>
    %9 = vector.multi_reduction <add>, %8, %cst_5 [0] : vector<8x512xf32> to vector<512xf32>
    %10 = vector.shape_cast %9 : vector<512xf32> to vector<1x512xf32>
    %cst_6 = arith.constant 1.250000e-01 : f32
    %11 = vector.broadcast %cst_6 : f32 to vector<1x512xf32>
    %12 = arith.mulf %10, %11 : vector<1x512xf32>
    %13 = arith.mulf %7, %7 : vector<1x512xf32>
    %14 = arith.subf %12, %13 : vector<1x512xf32>
    %c0_7 = arith.constant 0 : index
    %c0_8 = arith.constant 0 : index
    %15 = vector.load %arg2[%c0_7, %c0_8] : memref<1x512xf32, #tpu.memory_space<vmem>>, vector<1x512xf32>
    %cst_9 = arith.constant 9.99999974E-6 : f32
    %16 = vector.broadcast %cst_9 : f32 to vector<1x512xf32>
    %17 = arith.addf %14, %16 : vector<1x512xf32>
    %18 = math.rsqrt %17 : vector<1x512xf32>
    %19 = arith.mulf %15, %18 : vector<1x512xf32>
    %c0_10 = arith.constant 0 : index
    %c0_11 = arith.constant 0 : index
    %20 = vector.load %arg3[%c0_10, %c0_11] : memref<1x512xf32, #tpu.memory_space<vmem>>, vector<1x512xf32>
    %21 = arith.mulf %7, %19 : vector<1x512xf32>
    %22 = arith.subf %20, %21 : vector<1x512xf32>
    %23 = vector.broadcast %19 : vector<1x512xf32> to vector<8x512xf32>
    %24 = arith.mulf %3, %23 : vector<8x512xf32>
    %25 = vector.broadcast %22 : vector<1x512xf32> to vector<8x512xf32>
    %26 = arith.addf %24, %25 : vector<8x512xf32>
    %cst_12 = arith.constant 0.000000e+00 : f32
    %27 = vector.broadcast %cst_12 : f32 to vector<8x512xf32>
    %28 = arith.maximumf %26, %27 : vector<8x512xf32>
    %29 = arith.truncf %28 : vector<8x512xf32> to vector<8x512xbf16>
    %c0_13 = arith.constant 0 : index
    %c0_14 = arith.constant 0 : index
    %30 = vector.load %arg4[%c0_13, %c0_14] : memref<512x256xbf16, #tpu.memory_space<vmem>>, vector<512x256xbf16>
    %cst_15 = arith.constant dense<0.000000e+00> : vector<8x256xf32>
    %31 = tpu.matmul %29, %30, %cst_15 {dimension_numbers = #tpu.dot_dimension_numbers<[1], [0], [0], [1], [0, 0, 1, 1], [], []>} : vector<8x512xbf16>, vector<512x256xbf16>, vector<8x256xf32> -> vector<8x256xf32>
    %cst_16 = arith.constant dense<0.000000e+00> : vector<256xf32>
    %32 = vector.multi_reduction <add>, %31, %cst_16 [0] : vector<8x256xf32> to vector<256xf32>
    %33 = vector.shape_cast %32 : vector<256xf32> to vector<1x256xf32>
    %cst_17 = arith.constant 1.250000e-01 : f32
    %34 = vector.broadcast %cst_17 : f32 to vector<1x256xf32>
    %35 = arith.mulf %33, %34 : vector<1x256xf32>
    %36 = arith.mulf %31, %31 : vector<8x256xf32>
    %cst_18 = arith.constant dense<0.000000e+00> : vector<256xf32>
    %37 = vector.multi_reduction <add>, %36, %cst_18 [0] : vector<8x256xf32> to vector<256xf32>
    %38 = vector.shape_cast %37 : vector<256xf32> to vector<1x256xf32>
    %cst_19 = arith.constant 1.250000e-01 : f32
    %39 = vector.broadcast %cst_19 : f32 to vector<1x256xf32>
    %40 = arith.mulf %38, %39 : vector<1x256xf32>
    %41 = arith.mulf %35, %35 : vector<1x256xf32>
    %42 = arith.subf %40, %41 : vector<1x256xf32>
    %c0_20 = arith.constant 0 : index
    %c0_21 = arith.constant 0 : index
    %43 = vector.load %arg5[%c0_20, %c0_21] : memref<1x256xf32, #tpu.memory_space<vmem>>, vector<1x256xf32>
    %cst_22 = arith.constant 9.99999974E-6 : f32
    %44 = vector.broadcast %cst_22 : f32 to vector<1x256xf32>
    %45 = arith.addf %42, %44 : vector<1x256xf32>
    %46 = math.rsqrt %45 : vector<1x256xf32>
    %47 = arith.mulf %43, %46 : vector<1x256xf32>
    %c0_23 = arith.constant 0 : index
    %c0_24 = arith.constant 0 : index
    %48 = vector.load %arg6[%c0_23, %c0_24] : memref<1x256xf32, #tpu.memory_space<vmem>>, vector<1x256xf32>
    %49 = arith.mulf %35, %47 : vector<1x256xf32>
    %50 = arith.subf %48, %49 : vector<1x256xf32>
    %51 = vector.broadcast %47 : vector<1x256xf32> to vector<8x256xf32>
    %52 = arith.mulf %31, %51 : vector<8x256xf32>
    %53 = vector.broadcast %50 : vector<1x256xf32> to vector<8x256xf32>
    %54 = arith.addf %52, %53 : vector<8x256xf32>
    %cst_25 = arith.constant 0.000000e+00 : f32
    %55 = vector.broadcast %cst_25 : f32 to vector<8x256xf32>
    %56 = arith.maximumf %54, %55 : vector<8x256xf32>
    %c0_26 = arith.constant 0 : index
    %c0_27 = arith.constant 0 : index
    %57 = vector.load %arg7[%c0_26, %c0_27] : memref<256x4xf32, #tpu.memory_space<vmem>>, vector<256x4xf32>
    %cst_28 = arith.constant dense<0.000000e+00> : vector<8x4xf32>
    %58 = tpu.matmul %56, %57, %cst_28 {dimension_numbers = #tpu.dot_dimension_numbers<[1], [0], [0], [1], [0, 0, 1, 1], [], []>} : vector<8x256xf32>, vector<256x4xf32>, vector<8x4xf32> -> vector<8x4xf32>
    %c0_29 = arith.constant 0 : index
    %c0_30 = arith.constant 0 : index
    %59 = vector.load %arg8[%c0_29, %c0_30] : memref<1x4xf32, #tpu.memory_space<vmem>>, vector<1x4xf32>
    %60 = vector.broadcast %59 : vector<1x4xf32> to vector<8x4xf32>
    %61 = arith.addf %58, %60 : vector<8x4xf32>
    %62 = vector.extract_strided_slice %61 {offsets = [0, 0], sizes = [8, 1], strides = [1, 1]} : vector<8x4xf32> to vector<8x1xf32>
    %cst_31 = arith.constant 1.000000e+00 : f32
    %63 = vector.broadcast %cst_31 : f32 to vector<8x1xf32>
    %64 = arith.addf %62, %63 : vector<8x1xf32>
    %65 = vector.extract_strided_slice %61 {offsets = [0, 1], sizes = [8, 1], strides = [1, 1]} : vector<8x4xf32> to vector<8x1xf32>
    %66 = vector.extract_strided_slice %61 {offsets = [0, 2], sizes = [8, 1], strides = [1, 1]} : vector<8x4xf32> to vector<8x1xf32>
    %67 = vector.extract_strided_slice %61 {offsets = [0, 3], sizes = [8, 1], strides = [1, 1]} : vector<8x4xf32> to vector<8x1xf32>
    %68 = arith.mulf %64, %64 : vector<8x1xf32>
    %69 = arith.mulf %65, %65 : vector<8x1xf32>
    %70 = arith.addf %68, %69 : vector<8x1xf32>
    %71 = arith.mulf %66, %66 : vector<8x1xf32>
    %72 = arith.addf %70, %71 : vector<8x1xf32>
    %73 = arith.mulf %67, %67 : vector<8x1xf32>
    %74 = arith.addf %72, %73 : vector<8x1xf32>
    %75 = tpu.reciprocal %74 {approx = true} : vector<8x1xf32> -> vector<8x1xf32>
    %cst_32 = arith.constant 2.000000e+00 : f32
    %76 = vector.broadcast %cst_32 : f32 to vector<8x1xf32>
    %77 = arith.mulf %76, %75 : vector<8x1xf32>
    %78 = arith.mulf %66, %66 : vector<8x1xf32>
    %79 = arith.mulf %67, %67 : vector<8x1xf32>
    %80 = arith.addf %78, %79 : vector<8x1xf32>
    %81 = arith.mulf %80, %77 : vector<8x1xf32>
    %cst_33 = arith.constant 1.000000e+00 : f32
    %82 = vector.broadcast %cst_33 : f32 to vector<8x1xf32>
    %83 = arith.subf %82, %81 : vector<8x1xf32>
    %84 = arith.mulf %65, %66 : vector<8x1xf32>
    %85 = arith.mulf %67, %64 : vector<8x1xf32>
    %86 = arith.subf %84, %85 : vector<8x1xf32>
    %87 = arith.mulf %86, %77 : vector<8x1xf32>
    %88 = arith.mulf %65, %67 : vector<8x1xf32>
    %89 = arith.mulf %66, %64 : vector<8x1xf32>
    %90 = arith.addf %88, %89 : vector<8x1xf32>
    %91 = arith.mulf %90, %77 : vector<8x1xf32>
    %92 = arith.mulf %65, %66 : vector<8x1xf32>
    %93 = arith.mulf %67, %64 : vector<8x1xf32>
    %94 = arith.addf %92, %93 : vector<8x1xf32>
    %95 = arith.mulf %94, %77 : vector<8x1xf32>
    %96 = arith.mulf %65, %65 : vector<8x1xf32>
    %97 = arith.mulf %67, %67 : vector<8x1xf32>
    %98 = arith.addf %96, %97 : vector<8x1xf32>
    %99 = arith.mulf %98, %77 : vector<8x1xf32>
    %cst_34 = arith.constant 1.000000e+00 : f32
    %100 = vector.broadcast %cst_34 : f32 to vector<8x1xf32>
    %101 = arith.subf %100, %99 : vector<8x1xf32>
    %102 = arith.mulf %66, %67 : vector<8x1xf32>
    %103 = arith.mulf %65, %64 : vector<8x1xf32>
    %104 = arith.subf %102, %103 : vector<8x1xf32>
    %105 = arith.mulf %104, %77 : vector<8x1xf32>
    %106 = arith.mulf %65, %67 : vector<8x1xf32>
    %107 = arith.mulf %66, %64 : vector<8x1xf32>
    %108 = arith.subf %106, %107 : vector<8x1xf32>
    %109 = arith.mulf %108, %77 : vector<8x1xf32>
    %110 = arith.mulf %66, %67 : vector<8x1xf32>
    %111 = arith.mulf %65, %64 : vector<8x1xf32>
    %112 = arith.addf %110, %111 : vector<8x1xf32>
    %113 = arith.mulf %112, %77 : vector<8x1xf32>
    %114 = arith.mulf %65, %65 : vector<8x1xf32>
    %115 = arith.mulf %66, %66 : vector<8x1xf32>
    %116 = arith.addf %114, %115 : vector<8x1xf32>
    %117 = arith.mulf %116, %77 : vector<8x1xf32>
    %cst_35 = arith.constant 1.000000e+00 : f32
    %118 = vector.broadcast %cst_35 : f32 to vector<8x1xf32>
    %119 = arith.subf %118, %117 : vector<8x1xf32>
    %120 = tpu.concatenate %83, %87, %91, %95, %101, %105, %109, %113, %119 in 1 : vector<8x1xf32>, vector<8x1xf32>, vector<8x1xf32>, vector<8x1xf32>, vector<8x1xf32>, vector<8x1xf32>, vector<8x1xf32>, vector<8x1xf32>, vector<8x1xf32> -> vector<8x9xf32>
    %c0_36 = arith.constant 0 : index
    %c0_37 = arith.constant 0 : index
    %121 = vector.load %arg9[%c0_36, %c0_37] : memref<8x9xf32, #tpu.memory_space<vmem>>, vector<8x9xf32>
    tpu.vector_store %arg9[%c0_36, %c0_37], %120 {strides = array<i32>} : memref<8x9xf32, #tpu.memory_space<vmem>>, vector<8x9xf32>,
    return
  }
}

</mosaic_0001>

<llo_original>
// kernel: tpu_custom_call.1
$region0: #{tpu_custom_call.1}
  #allocation0 [shape = 'u32[]', space=smem, size = 0x4, offset = 0x4, fixed_abs, tag = 'smem constant byte address 0x4 - core index']
  #allocation1 [shape = 'u32[144,128]{1,0:T(1,128)}', space=vmem, size = 0x12000, scoped, tag = 'internal scratch']
  %s0 = inlined_call_operand.hbm [shape: f32[8,1056], index: 0, kind: input, shape index: {}]
  %s1 = inlined_call_operand.hbm [shape: bf16[1056,512], index: 1, kind: input, shape index: {}]
  %s2 = inlined_call_operand.hbm [shape: f32[1,512], index: 2, kind: input, shape index: {}]
  %s3 = inlined_call_operand.hbm [shape: f32[1,512], index: 3, kind: input, shape index: {}]
  %s4 = inlined_call_operand.hbm [shape: bf16[512,256], index: 4, kind: input, shape index: {}]
  %s5 = inlined_call_operand.hbm [shape: f32[1,256], index: 5, kind: input, shape index: {}]
  %s6 = inlined_call_operand.hbm [shape: f32[1,256], index: 6, kind: input, shape index: {}]
  %s7 = inlined_call_operand.vmem [shape: f32[256,4], index: 7, kind: input, shape index: {}]
  %s8 = inlined_call_operand.hbm [shape: f32[1,4], index: 8, kind: input, shape index: {}]
  %s9 = inlined_call_operand.hbm [shape: f32[8,9], index: 9, kind: output, shape index: {}]
  %s10 = sld [smem:[#allocation0]]
  $region78: #{tpu_custom_call.1} parent=0
    _
  %s12 = ssub.s32 1, %s10
  %s13 = scalar_select 0, %s12, %s10
  $region1: #{tpu_custom_call.1} parent=0
    #allocation2 [shape = 'u8[36864]{0}', space=vmem, size = 0x9000, scoped, tag = 'input window, operand 0, single buffered']
    #allocation3 [shape = 's32[1]{0}', space=sflag, size = 0x4, scoped, tag = 'scoped memory for tpu_custom_call.1']
    #allocation4 [shape = 's32[1]{0}', space=sflag, size = 0x4, scoped, tag = 'scoped memory for tpu_custom_call.1']
    #allocation5 [shape = 'u8[1081344]{0}', space=vmem, size = 0x108000, scoped, tag = 'input window, operand 1, single buffered']
    #allocation6 [shape = 's32[1]{0}', space=sflag, size = 0x4, scoped, tag = 'scoped memory for tpu_custom_call.1']
    #allocation7 [shape = 'u8[2048]{0}', space=vmem, size = 0x800, scoped, tag = 'input window, operand 2, single buffered']
    #allocation8 [shape = 'u8[2048]{0}', space=vmem, size = 0x800, scoped, tag = 'input window, operand 3, single buffered']
    #allocation9 [shape = 's32[1]{0}', space=sflag, size = 0x4, scoped, tag = 'scoped memory for tpu_custom_call.1']
    #allocation10 [shape = 'u8[262144]{0}', space=vmem, size = 0x40000, scoped, tag = 'input window, operand 4, single buffered']
    #allocation11 [shape = 'u8[1024]{0}', space=vmem, size = 0x400, scoped, tag = 'input window, operand 5, single buffered']
    #allocation12 [shape = 's32[1]{0}', space=sflag, size = 0x4, scoped, tag = 'scoped memory for tpu_custom_call.1']
    #allocation13 [shape = 'u8[1024]{0}', space=vmem, size = 0x400, scoped, tag = 'input window, operand 6, single buffered']
    #allocation14 [shape = 'u8[512]{0}', space=vmem, size = 0x400, scoped, tag = 'input window, operand 8, single buffered']
    #allocation15 [shape = 's32[1]{0}', space=sflag, size = 0x4, scoped, tag = 'scoped memory for tpu_custom_call.1']
    #allocation16 [shape = 'u8[4096]{0}', space=vmem, size = 0x1000, scoped, tag = 'output window, operand 0, single buffered']
    %14 = vsyncpa [#allocation3], 0
    %15 = vsyncpa [#allocation6], 0
    %16 = vsyncpa [#allocation9], 0
    %17 = vsyncpa [#allocation12], 0
    %18 = vsyncpa [#allocation15], 0
    %19 = vsyncpa [#allocation4], 0
    // Predicated region
    $region2: #{tpu_custom_call.1} parent=1 // pred_check
      _
    $region3: #{tpu_custom_call.1} parent=1 // pred_check_branch
      %21 = sbr.rel (0) target = $region5
    $region4: #{tpu_custom_call.1} parent=1 // pred_region
      %s23 = ssub.s32 1152, 1152
      %24 = vsyncadd [#allocation3], %s23
      %s26 = sshll.u32 [#allocation2], 4
      %s27 = int_to_ptr.vmem [resolvable:$true] %s26
      %29 = dma.hbm_to_vmem [thread:$0]  %s0, 1152, %s27, [#allocation3]
    $region5: #{tpu_custom_call.1} parent=1 // pred_fallthru
      _
    // Predicated region
    $region6: #{tpu_custom_call.1} parent=1 // pred_check
      _
    $region7: #{tpu_custom_call.1} parent=1 // pred_check_branch
      %31 = sbr.rel (0) target = $region9
    $region8: #{tpu_custom_call.1} parent=1 // pred_region
      %s33 = ssub.s32 33792, 33792
      %34 = vsyncadd [#allocation6], %s33
      %s35 = sshll.u32 [#allocation5], 4
      %s36 = int_to_ptr.vmem [resolvable:$true] %s35
      %41 = dma.hbm_to_vmem [thread:$0]  %s1, 33792, %s36, [#allocation6], 256, 256, 16
    $region9: #{tpu_custom_call.1} parent=1 // pred_fallthru
      _
    // Predicated region
    $region10: #{tpu_custom_call.1} parent=1 // pred_check
      _
    $region11: #{tpu_custom_call.1} parent=1 // pred_check_branch
      %43 = sbr.rel (0) target = $region13
    $region12: #{tpu_custom_call.1} parent=1 // pred_region
      %s45 = ssub.s32 64, 64
      %46 = vsyncadd [#allocation6], %s45
      %s48 = sshll.u32 [#allocation7], 4
      %s49 = int_to_ptr.vmem [resolvable:$true] %s48
      %51 = dma.hbm_to_vmem [thread:$0]  %s2, 64, %s49, [#allocation6]
    $region13: #{tpu_custom_call.1} parent=1 // pred_fallthru
      _
    // Predicated region
    $region14: #{tpu_custom_call.1} parent=1 // pred_check
      _
    $region15: #{tpu_custom_call.1} parent=1 // pred_check_branch
      %53 = sbr.rel (0) target = $region17
    $region16: #{tpu_custom_call.1} parent=1 // pred_region
      %s55 = ssub.s32 64, 64
      %56 = vsyncadd [#allocation9], %s55
      %s58 = sshll.u32 [#allocation8], 4
      %s59 = int_to_ptr.vmem [resolvable:$true] %s58
      %61 = dma.hbm_to_vmem [thread:$0]  %s3, 64, %s59, [#allocation9]
    $region17: #{tpu_custom_call.1} parent=1 // pred_fallthru
      _
    // Predicated region
    $region18: #{tpu_custom_call.1} parent=1 // pred_check
      _
    $region19: #{tpu_custom_call.1} parent=1 // pred_check_branch
      %63 = sbr.rel (0) target = $region21
    $region20: #{tpu_custom_call.1} parent=1 // pred_region
      %s65 = ssub.s32 8192, 8192
      %66 = vsyncadd [#allocation9], %s65
      %s67 = sshll.u32 [#allocation10], 4
      %s68 = int_to_ptr.vmem [resolvable:$true] %s67
      %73 = dma.hbm_to_vmem [thread:$0]  %s4, 8192, %s68, [#allocation9], 128, 128, 8
    $region21: #{tpu_custom_call.1} parent=1 // pred_fallthru
      _
    // Predicated region
    $region22: #{tpu_custom_call.1} parent=1 // pred_check
      _
    $region23: #{tpu_custom_call.1} parent=1 // pred_check_branch
      %75 = sbr.rel (0) target = $region25
    $region24: #{tpu_custom_call.1} parent=1 // pred_region
      %s77 = ssub.s32 32, 32
      %78 = vsyncadd [#allocation12], %s77
      %s80 = sshll.u32 [#allocation11], 4
      %s81 = int_to_ptr.vmem [resolvable:$true] %s80
      %83 = dma.hbm_to_vmem [thread:$0]  %s5, 32, %s81, [#allocation12]
    $region25: #{tpu_custom_call.1} parent=1 // pred_fallthru
      _
    // Predicated region
    $region26: #{tpu_custom_call.1} parent=1 // pred_check
      _
    $region27: #{tpu_custom_call.1} parent=1 // pred_check_branch
      %85 = sbr.rel (0) target = $region29
    $region28: #{tpu_custom_call.1} parent=1 // pred_region
      %s87 = ssub.s32 32, 32
      %88 = vsyncadd [#allocation12], %s87
      %s90 = sshll.u32 [#allocation13], 4
      %s91 = int_to_ptr.vmem [resolvable:$true] %s90
      %93 = dma.hbm_to_vmem [thread:$0]  %s6, 32, %s91, [#allocation12]
    $region29: #{tpu_custom_call.1} parent=1 // pred_fallthru
      _
    // Predicated region
    $region30: #{tpu_custom_call.1} parent=1 // pred_check
      _
    $region31: #{tpu_custom_call.1} parent=1 // pred_check_branch
      %95 = sbr.rel (0) target = $region33
    $region32: #{tpu_custom_call.1} parent=1 // pred_region
      _
    $region33: #{tpu_custom_call.1} parent=1 // pred_fallthru
      _
    // Predicated region
    $region34: #{tpu_custom_call.1} parent=1 // pred_check
      _
    $region35: #{tpu_custom_call.1} parent=1 // pred_check_branch
      %97 = sbr.rel (0) target = $region37
    $region36: #{tpu_custom_call.1} parent=1 // pred_region
      %s99 = ssub.s32 16, 16
      %100 = vsyncadd [#allocation15], %s99
      %s102 = sshll.u32 [#allocation14], 4
      %s103 = int_to_ptr.vmem [resolvable:$true] %s102
      %105 = dma.hbm_to_vmem [thread:$0]  %s8, 16, %s103, [#allocation15]
    $region37: #{tpu_custom_call.1} parent=1 // pred_fallthru
      _
    // Predicated region
    $region38: #{tpu_custom_call.1} parent=1 // pred_check
      _
    $region39: #{tpu_custom_call.1} parent=1 // pred_check_branch
      %107 = sbr.rel (0) target = $region41
    $region40: #{tpu_custom_call.1} parent=1 // pred_region
      %108 = dma.done [#allocation3], 1152
    $region41: #{tpu_custom_call.1} parent=1 // pred_fallthru
      _
    // Predicated region
    $region42: #{tpu_custom_call.1} parent=1 // pred_check
      _
    $region43: #{tpu_custom_call.1} parent=1 // pred_check_branch
      %110 = sbr.rel (0) target = $region45
    $region44: #{tpu_custom_call.1} parent=1 // pred_region
      %111 = dma.done [#allocation6], 33792
    $region45: #{tpu_custom_call.1} parent=1 // pred_fallthru
      _
    // Predicated region
    $region46: #{tpu_custom_call.1} parent=1 // pred_check
      _
    $region47: #{tpu_custom_call.1} parent=1 // pred_check_branch
      %113 = sbr.rel (0) target = $region49
    $region48: #{tpu_custom_call.1} parent=1 // pred_region
      %114 = dma.done [#allocation6], 64
    $region49: #{tpu_custom_call.1} parent=1 // pred_fallthru
      _
    // Predicated region
    $region50: #{tpu_custom_call.1} parent=1 // pred_check
      _
    $region51: #{tpu_custom_call.1} parent=1 // pred_check_branch
      %116 = sbr.rel (0) target = $region53
    $region52: #{tpu_custom_call.1} parent=1 // pred_region
      %117 = dma.done [#allocation9], 64
    $region53: #{tpu_custom_call.1} parent=1 // pred_fallthru
      _
    // Predicated region
    $region54: #{tpu_custom_call.1} parent=1 // pred_check
      _
    $region55: #{tpu_custom_call.1} parent=1 // pred_check_branch
      %119 = sbr.rel (0) target = $region57
    $region56: #{tpu_custom_call.1} parent=1 // pred_region
      %120 = dma.done [#allocation9], 8192
    $region57: #{tpu_custom_call.1} parent=1 // pred_fallthru
      _
    // Predicated region
    $region58: #{tpu_custom_call.1} parent=1 // pred_check
      _
    $region59: #{tpu_custom_call.1} parent=1 // pred_check_branch
      %122 = sbr.rel (0) target = $region61
    $region60: #{tpu_custom_call.1} parent=1 // pred_region
      %123 = dma.done [#allocation12], 32
    $region61: #{tpu_custom_call.1} parent=1 // pred_fallthru
      _
    // Predicated region
    $region62: #{tpu_custom_call.1} parent=1 // pred_check
      _
    $region63: #{tpu_custom_call.1} parent=1 // pred_check_branch
      %125 = sbr.rel (0) target = $region65
    $region64: #{tpu_custom_call.1} parent=1 // pred_region
      %126 = dma.done [#allocation12], 32
    $region65: #{tpu_custom_call.1} parent=1 // pred_fallthru
      _
    // Predicated region
    $region66: #{tpu_custom_call.1} parent=1 // pred_check
      _
    $region67: #{tpu_custom_call.1} parent=1 // pred_check_branch
      %128 = sbr.rel (0) target = $region69
    $region68: #{tpu_custom_call.1} parent=1 // pred_region
      %129 = dma.done [#allocation15], 16
    $region69: #{tpu_custom_call.1} parent=1 // pred_fallthru
      _
    %v131 = vld [vmem:[#allocation2] sm:$0xff]
    %v132 = vld [vmem:[#allocation2 + $0x8] sm:$0xff]
    %v133 = vld [vmem:[#allocation2 + $0x10] sm:$0xff]
    %v134 = vld [vmem:[#allocation2 + $0x18] sm:$0xff]
    %v135 = vld [vmem:[#allocation2 + $0x20] sm:$0xff]
    %v136 = vld [vmem:[#allocation2 + $0x28] sm:$0xff]
    %v137 = vld [vmem:[#allocation2 + $0x30] sm:$0xff]
    %v138 = vld [vmem:[#allocation2 + $0x38] sm:$0xff]
    %v139 = vld [vmem:[#allocation2 + $0x40] sm:$0xff]
    %v140 = vpack.c.bf16 %v131, %v131
    %v141 = vpack.c.bf16 %v132, %v132
    %v142 = vpack.c.bf16 %v133, %v133
    %v143 = vpack.c.bf16 %v134, %v134
    %v144 = vpack.c.bf16 %v135, %v135
    %v145 = vpack.c.bf16 %v136, %v136
    %v146 = vpack.c.bf16 %v137, %v137
    %v147 = vpack.c.bf16 %v138, %v138
    %v148 = vpack.c.bf16 %v139, %v139
    %v149 = vld [vmem:[#allocation5] sm:$0xff]
    %v150 = vld [vmem:[#allocation5 + $0x8] sm:$0xff]
    %v151 = vld [vmem:[#allocation5 + $0x10] sm:$0xff]
    %v152 = vld [vmem:[#allocation5 + $0x18] sm:$0xff]
    %v153 = vld [vmem:[#allocation5 + $0x20] sm:$0xff]
    %v154 = vld [vmem:[#allocation5 + $0x28] sm:$0xff]
    %v155 = vld [vmem:[#allocation5 + $0x30] sm:$0xff]
    %v156 = vld [vmem:[#allocation5 + $0x38] sm:$0xff]
    %v157 = vld [vmem:[#allocation5 + $0x40] sm:$0xff]
    %v158 = vld [vmem:[#allocation5 + $0x48] sm:$0xff]
    %v159 = vld [vmem:[#allocation5 + $0x50] sm:$0xff]
    %v160 = vld [vmem:[#allocation5 + $0x58] sm:$0xff]
    %v161 = vld [vmem:[#allocation5 + $0x60] sm:$0xff]
    %v162 = vld [vmem:[#allocation5 + $0x68] sm:$0xff]
    %v163 = vld [vmem:[#allocation5 + $0x70] sm:$0xff]
    %v164 = vld [vmem:[#allocation5 + $0x78] sm:$0xff]
    %v165 = vld [vmem:[#allocation5 + $0x80] sm:$0xff]
    %v166 = vld [vmem:[#allocation5 + $0x88] sm:$0xff]
    %v167 = vld [vmem:[#allocation5 + $0x90] sm:$0xff]
    %v168 = vld [vmem:[#allocation5 + $0x98] sm:$0xff]
    %v169 = vld [vmem:[#allocation5 + $0xa0] sm:$0xff]
    %v170 = vld [vmem:[#allocation5 + $0xa8] sm:$0xff]
    %v171 = vld [vmem:[#allocation5 + $0xb0] sm:$0xff]
    %v172 = vld [vmem:[#allocation5 + $0xb8] sm:$0xff]
    %v173 = vld [vmem:[#allocation5 + $0xc0] sm:$0xff]
    %v174 = vld [vmem:[#allocation5 + $0xc8] sm:$0xff]
    %v175 = vld [vmem:[#allocation5 + $0xd0] sm:$0xff]
    %v176 = vld [vmem:[#allocation5 + $0xd8] sm:$0xff]
    %v177 = vld [vmem:[#allocation5 + $0xe0] sm:$0xff]
    %v178 = vld [vmem:[#allocation5 + $0xe8] sm:$0xff]
    %v179 = vld [vmem:[#allocation5 + $0xf0] sm:$0xff]
    %v180 = vld [vmem:[#allocation5 + $0xf8] sm:$0xff]
    %v181 = vld [vmem:[#allocation5 + $0x100] sm:$0xff]
    %v182 = vld [vmem:[#allocation5 + $0x108] sm:$0xff]
    %v183 = vld [vmem:[#allocation5 + $0x110] sm:$0xff]
    %v184 = vld [vmem:[#allocation5 + $0x118] sm:$0xff]
    %v185 = vld [vmem:[#allocation5 + $0x120] sm:$0xff]
    %v186 = vld [vmem:[#allocation5 + $0x128] sm:$0xff]
    %v187 = vld [vmem:[#allocation5 + $0x130] sm:$0xff]
    %v188 = vld [vmem:[#allocation5 + $0x138] sm:$0xff]
    %v189 = vld [vmem:[#allocation5 + $0x140] sm:$0xff]
    %v190 = vld [vmem:[#allocation5 + $0x148] sm:$0xff]
    %v191 = vld [vmem:[#allocation5 + $0x150] sm:$0xff]
    %v192 = vld [vmem:[#allocation5 + $0x158] sm:$0xff]
    %v193 = vld [vmem:[#allocation5 + $0x160] sm:$0xff]
    %v194 = vld [vmem:[#allocation5 + $0x168] sm:$0xff]
    %v195 = vld [vmem:[#allocation5 + $0x170] sm:$0xff]
    %v196 = vld [vmem:[#allocation5 + $0x178] sm:$0xff]
    %v197 = vld [vmem:[#allocation5 + $0x180] sm:$0xff]
    %v198 = vld [vmem:[#allocation5 + $0x188] sm:$0xff]
    %v199 = vld [vmem:[#allocation5 + $0x190] sm:$0xff]
    %v200 = vld [vmem:[#allocation5 + $0x198] sm:$0xff]
    %v201 = vld [vmem:[#allocation5 + $0x1a0] sm:$0xff]
    %v202 = vld [vmem:[#allocation5 + $0x1a8] sm:$0xff]
    %v203 = vld [vmem:[#allocation5 + $0x1b0] sm:$0xff]
    %v204 = vld [vmem:[#allocation5 + $0x1b8] sm:$0xff]
    %v205 = vld [vmem:[#allocation5 + $0x1c0] sm:$0xff]
    %v206 = vld [vmem:[#allocation5 + $0x1c8] sm:$0xff]
    %v207 = vld [vmem:[#allocation5 + $0x1d0] sm:$0xff]
    %v208 = vld [vmem:[#allocation5 + $0x1d8] sm:$0xff]
    %v209 = vld [vmem:[#allocation5 + $0x1e0] sm:$0xff]
    %v210 = vld [vmem:[#allocation5 + $0x1e8] sm:$0xff]
    %v211 = vld [vmem:[#allocation5 + $0x1f0] sm:$0xff]
    %v212 = vld [vmem:[#allocation5 + $0x1f8] sm:$0xff]
    %v213 = vld [vmem:[#allocation5 + $0x200] sm:$0xff]
    %v214 = vld [vmem:[#allocation5 + $0x208] sm:$0xff]
    %v215 = vld [vmem:[#allocation5 + $0x210] sm:$0xff]
    %v216 = vld [vmem:[#allocation5 + $0x218] sm:$0xff]
    %v217 = vld [vmem:[#allocation5 + $0x220] sm:$0xff]
    %v218 = vld [vmem:[#allocation5 + $0x228] sm:$0xff]
    %v219 = vld [vmem:[#allocation5 + $0x230] sm:$0xff]
    %v220 = vld [vmem:[#allocation5 + $0x238] sm:$0xff]
    %v221 = vld [vmem:[#allocation5 + $0x240] sm:$0xff]
    %v222 = vld [vmem:[#allocation5 + $0x248] sm:$0xff]
    %v223 = vld [vmem:[#allocation5 + $0x250] sm:$0xff]
    %v224 = vld [vmem:[#allocation5 + $0x258] sm:$0xff]
    %v225 = vld [vmem:[#allocation5 + $0x260] sm:$0xff]
    %v226 = vld [vmem:[#allocation5 + $0x268] sm:$0xff]
    %v227 = vld [vmem:[#allocation5 + $0x270] sm:$0xff]
    %v228 = vld [vmem:[#allocation5 + $0x278] sm:$0xff]
    %v229 = vld [vmem:[#allocation5 + $0x280] sm:$0xff]
    %v230 = vld [vmem:[#allocation5 + $0x288] sm:$0xff]
    %v231 = vld [vmem:[#allocation5 + $0x290] sm:$0xff]
    %v232 = vld [vmem:[#allocation5 + $0x298] sm:$0xff]
    %v233 = vld [vmem:[#allocation5 + $0x2a0] sm:$0xff]
    %v234 = vld [vmem:[#allocation5 + $0x2a8] sm:$0xff]
    %v235 = vld [vmem:[#allocation5 + $0x2b0] sm:$0xff]
    %v236 = vld [vmem:[#allocation5 + $0x2b8] sm:$0xff]
    %v237 = vld [vmem:[#allocation5 + $0x2c0] sm:$0xff]
    %v238 = vld [vmem:[#allocation5 + $0x2c8] sm:$0xff]
    %v239 = vld [vmem:[#allocation5 + $0x2d0] sm:$0xff]
    %v240 = vld [vmem:[#allocation5 + $0x2d8] sm:$0xff]
    %v241 = vld [vmem:[#allocation5 + $0x2e0] sm:$0xff]
    %v242 = vld [vmem:[#allocation5 + $0x2e8] sm:$0xff]
    %v243 = vld [vmem:[#allocation5 + $0x2f0] sm:$0xff]
    %v244 = vld [vmem:[#allocation5 + $0x2f8] sm:$0xff]
    %v245 = vld [vmem:[#allocation5 + $0x300] sm:$0xff]
    %v246 = vld [vmem:[#allocation5 + $0x308] sm:$0xff]
    %v247 = vld [vmem:[#allocation5 + $0x310] sm:$0xff]
    %v248 = vld [vmem:[#allocation5 + $0x318] sm:$0xff]
    %v249 = vld [vmem:[#allocation5 + $0x320] sm:$0xff]
    %v250 = vld [vmem:[#allocation5 + $0x328] sm:$0xff]
    %v251 = vld [vmem:[#allocation5 + $0x330] sm:$0xff]
    %v252 = vld [vmem:[#allocation5 + $0x338] sm:$0xff]
    %v253 = vld [vmem:[#allocation5 + $0x340] sm:$0xff]
    %v254 = vld [vmem:[#allocation5 + $0x348] sm:$0xff]
    %v255 = vld [vmem:[#allocation5 + $0x350] sm:$0xff]
    %v256 = vld [vmem:[#allocation5 + $0x358] sm:$0xff]
    %v257 = vld [vmem:[#allocation5 + $0x360] sm:$0xff]
    %v258 = vld [vmem:[#allocation5 + $0x368] sm:$0xff]
    %v259 = vld [vmem:[#allocation5 + $0x370] sm:$0xff]
    %v260 = vld [vmem:[#allocation5 + $0x378] sm:$0xff]
    %v261 = vld [vmem:[#allocation5 + $0x380] sm:$0xff]
    %v262 = vld [vmem:[#allocation5 + $0x388] sm:$0xff]
    %v263 = vld [vmem:[#allocation5 + $0x390] sm:$0xff]
    %v264 = vld [vmem:[#allocation5 + $0x398] sm:$0xff]
    %v265 = vld [vmem:[#allocation5 + $0x3a0] sm:$0xff]
    %v266 = vld [vmem:[#allocation5 + $0x3a8] sm:$0xff]
    %v267 = vld [vmem:[#allocation5 + $0x3b0] sm:$0xff]
    %v268 = vld [vmem:[#allocation5 + $0x3b8] sm:$0xff]
    %v269 = vld [vmem:[#allocation5 + $0x3c0] sm:$0xff]
    %v270 = vld [vmem:[#allocation5 + $0x3c8] sm:$0xff]
    %v271 = vld [vmem:[#allocation5 + $0x3d0] sm:$0xff]
    %v272 = vld [vmem:[#allocation5 + $0x3d8] sm:$0xff]
    %v273 = vld [vmem:[#allocation5 + $0x3e0] sm:$0xff]
    %v274 = vld [vmem:[#allocation5 + $0x3e8] sm:$0xff]
    %v275 = vld [vmem:[#allocation5 + $0x3f0] sm:$0xff]
    %v276 = vld [vmem:[#allocation5 + $0x3f8] sm:$0xff]
    %v277 = vld [vmem:[#allocation5 + $0x400] sm:$0xff]
    %v278 = vld [vmem:[#allocation5 + $0x408] sm:$0xff]
    %v279 = vld [vmem:[#allocation5 + $0x410] sm:$0xff]
    %v280 = vld [vmem:[#allocation5 + $0x418] sm:$0xff]
    %v281 = vld [vmem:[#allocation5 + $0x420] sm:$0xff]
    %v282 = vld [vmem:[#allocation5 + $0x428] sm:$0xff]
    %v283 = vld [vmem:[#allocation5 + $0x430] sm:$0xff]
    %v284 = vld [vmem:[#allocation5 + $0x438] sm:$0xff]
    %v285 = vld [vmem:[#allocation5 + $0x440] sm:$0xff]
    %v286 = vld [vmem:[#allocation5 + $0x448] sm:$0xff]
    %v287 = vld [vmem:[#allocation5 + $0x450] sm:$0xff]
    %v288 = vld [vmem:[#allocation5 + $0x458] sm:$0xff]
    %v289 = vld [vmem:[#allocation5 + $0x460] sm:$0xff]
    %v290 = vld [vmem:[#allocation5 + $0x468] sm:$0xff]
    %v291 = vld [vmem:[#allocation5 + $0x470] sm:$0xff]
    %v292 = vld [vmem:[#allocation5 + $0x478] sm:$0xff]
    %v293 = vld [vmem:[#allocation5 + $0x480] sm:$0xff]
    %v294 = vld [vmem:[#allocation5 + $0x488] sm:$0xff]
    %v295 = vld [vmem:[#allocation5 + $0x490] sm:$0xff]
    %v296 = vld [vmem:[#allocation5 + $0x498] sm:$0xff]
    %v297 = vld [vmem:[#allocation5 + $0x4a0] sm:$0xff]
    %v298 = vld [vmem:[#allocation5 + $0x4a8] sm:$0xff]
    %v299 = vld [vmem:[#allocation5 + $0x4b0] sm:$0xff]
    %v300 = vld [vmem:[#allocation5 + $0x4b8] sm:$0xff]
    %v301 = vld [vmem:[#allocation5 + $0x4c0] sm:$0xff]
    %v302 = vld [vmem:[#allocation5 + $0x4c8] sm:$0xff]
    %v303 = vld [vmem:[#allocation5 + $0x4d0] sm:$0xff]
    %v304 = vld [vmem:[#allocation5 + $0x4d8] sm:$0xff]
    %v305 = vld [vmem:[#allocation5 + $0x4e0] sm:$0xff]
    %v306 = vld [vmem:[#allocation5 + $0x4e8] sm:$0xff]
    %v307 = vld [vmem:[#allocation5 + $0x4f0] sm:$0xff]
    %v308 = vld [vmem:[#allocation5 + $0x4f8] sm:$0xff]
    %v309 = vld [vmem:[#allocation5 + $0x500] sm:$0xff]
    %v310 = vld [vmem:[#allocation5 + $0x508] sm:$0xff]
    %v311 = vld [vmem:[#allocation5 + $0x510] sm:$0xff]
    %v312 = vld [vmem:[#allocation5 + $0x518] sm:$0xff]
    %v313 = vld [vmem:[#allocation5 + $0x520] sm:$0xff]
    %v314 = vld [vmem:[#allocation5 + $0x528] sm:$0xff]
    %v315 = vld [vmem:[#allocation5 + $0x530] sm:$0xff]
    %v316 = vld [vmem:[#allocation5 + $0x538] sm:$0xff]
    %v317 = vld [vmem:[#allocation5 + $0x540] sm:$0xff]
    %v318 = vld [vmem:[#allocation5 + $0x548] sm:$0xff]
    %v319 = vld [vmem:[#allocation5 + $0x550] sm:$0xff]
    %v320 = vld [vmem:[#allocation5 + $0x558] sm:$0xff]
    %v321 = vld [vmem:[#allocation5 + $0x560] sm:$0xff]
    %v322 = vld [vmem:[#allocation5 + $0x568] sm:$0xff]
    %v323 = vld [vmem:[#allocation5 + $0x570] sm:$0xff]
    %v324 = vld [vmem:[#allocation5 + $0x578] sm:$0xff]
    %v325 = vld [vmem:[#allocation5 + $0x580] sm:$0xff]
    %v326 = vld [vmem:[#allocation5 + $0x588] sm:$0xff]
    %v327 = vld [vmem:[#allocation5 + $0x590] sm:$0xff]
    %v328 = vld [vmem:[#allocation5 + $0x598] sm:$0xff]
    %v329 = vld [vmem:[#allocation5 + $0x5a0] sm:$0xff]
    %v330 = vld [vmem:[#allocation5 + $0x5a8] sm:$0xff]
    %v331 = vld [vmem:[#allocation5 + $0x5b0] sm:$0xff]
    %v332 = vld [vmem:[#allocation5 + $0x5b8] sm:$0xff]
    %v333 = vld [vmem:[#allocation5 + $0x5c0] sm:$0xff]
    %v334 = vld [vmem:[#allocation5 + $0x5c8] sm:$0xff]
    %v335 = vld [vmem:[#allocation5 + $0x5d0] sm:$0xff]
    %v336 = vld [vmem:[#allocation5 + $0x5d8] sm:$0xff]
    %v337 = vld [vmem:[#allocation5 + $0x5e0] sm:$0xff]
    %v338 = vld [vmem:[#allocation5 + $0x5e8] sm:$0xff]
    %v339 = vld [vmem:[#allocation5 + $0x5f0] sm:$0xff]
    %v340 = vld [vmem:[#allocation5 + $0x5f8] sm:$0xff]
    %v341 = vld [vmem:[#allocation5 + $0x600] sm:$0xff]
    %v342 = vld [vmem:[#allocation5 + $0x608] sm:$0xff]
    %v343 = vld [vmem:[#allocation5 + $0x610] sm:$0xff]
    %v344 = vld [vmem:[#allocation5 + $0x618] sm:$0xff]
    %v345 = vld [vmem:[#allocation5 + $0x620] sm:$0xff]
    %v346 = vld [vmem:[#allocation5 + $0x628] sm:$0xff]
    %v347 = vld [vmem:[#allocation5 + $0x630] sm:$0xff]
    %v348 = vld [vmem:[#allocation5 + $0x638] sm:$0xff]
    %v349 = vld [vmem:[#allocation5 + $0x640] sm:$0xff]
    %v350 = vld [vmem:[#allocation5 + $0x648] sm:$0xff]
    %v351 = vld [vmem:[#allocation5 + $0x650] sm:$0xff]
    %v352 = vld [vmem:[#allocation5 + $0x658] sm:$0xff]
    %v353 = vld [vmem:[#allocation5 + $0x660] sm:$0xff]
    %v354 = vld [vmem:[#allocation5 + $0x668] sm:$0xff]
    %v355 = vld [vmem:[#allocation5 + $0x670] sm:$0xff]
    %v356 = vld [vmem:[#allocation5 + $0x678] sm:$0xff]
    %v357 = vld [vmem:[#allocation5 + $0x680] sm:$0xff]
    %v358 = vld [vmem:[#allocation5 + $0x688] sm:$0xff]
    %v359 = vld [vmem:[#allocation5 + $0x690] sm:$0xff]
    %v360 = vld [vmem:[#allocation5 + $0x698] sm:$0xff]
    %v361 = vld [vmem:[#allocation5 + $0x6a0] sm:$0xff]
    %v362 = vld [vmem:[#allocation5 + $0x6a8] sm:$0xff]
    %v363 = vld [vmem:[#allocation5 + $0x6b0] sm:$0xff]
    %v364 = vld [vmem:[#allocation5 + $0x6b8] sm:$0xff]
    %v365 = vld [vmem:[#allocation5 + $0x6c0] sm:$0xff]
    %v366 = vld [vmem:[#allocation5 + $0x6c8] sm:$0xff]
    %v367 = vld [vmem:[#allocation5 + $0x6d0] sm:$0xff]
    %v368 = vld [vmem:[#allocation5 + $0x6d8] sm:$0xff]
    %v369 = vld [vmem:[#allocation5 + $0x6e0] sm:$0xff]
    %v370 = vld [vmem:[#allocation5 + $0x6e8] sm:$0xff]
    %v371 = vld [vmem:[#allocation5 + $0x6f0] sm:$0xff]
    %v372 = vld [vmem:[#allocation5 + $0x6f8] sm:$0xff]
    %v373 = vld [vmem:[#allocation5 + $0x700] sm:$0xff]
    %v374 = vld [vmem:[#allocation5 + $0x708] sm:$0xff]
    %v375 = vld [vmem:[#allocation5 + $0x710] sm:$0xff]
    %v376 = vld [vmem:[#allocation5 + $0x718] sm:$0xff]
    %v377 = vld [vmem:[#allocation5 + $0x720] sm:$0xff]
    %v378 = vld [vmem:[#allocation5 + $0x728] sm:$0xff]
    %v379 = vld [vmem:[#allocation5 + $0x730] sm:$0xff]
    %v380 = vld [vmem:[#allocation5 + $0x738] sm:$0xff]
    %v381 = vld [vmem:[#allocation5 + $0x740] sm:$0xff]
    %v382 = vld [vmem:[#allocation5 + $0x748] sm:$0xff]
    %v383 = vld [vmem:[#allocation5 + $0x750] sm:$0xff]
    %v384 = vld [vmem:[#allocation5 + $0x758] sm:$0xff]
    %v385 = vld [vmem:[#allocation5 + $0x760] sm:$0xff]
    %v386 = vld [vmem:[#allocation5 + $0x768] sm:$0xff]
    %v387 = vld [vmem:[#allocation5 + $0x770] sm:$0xff]
    %v388 = vld [vmem:[#allocation5 + $0x778] sm:$0xff]
    %v389 = vld [vmem:[#allocation5 + $0x780] sm:$0xff]
    %v390 = vld [vmem:[#allocation5 + $0x788] sm:$0xff]
    %v391 = vld [vmem:[#allocation5 + $0x790] sm:$0xff]
    %v392 = vld [vmem:[#allocation5 + $0x798] sm:$0xff]
    %v393 = vld [vmem:[#allocation5 + $0x7a0] sm:$0xff]
    %v394 = vld [vmem:[#allocation5 + $0x7a8] sm:$0xff]
    %v395 = vld [vmem:[#allocation5 + $0x7b0] sm:$0xff]
    %v396 = vld [vmem:[#allocation5 + $0x7b8] sm:$0xff]
    %v397 = vld [vmem:[#allocation5 + $0x7c0] sm:$0xff]
    %v398 = vld [vmem:[#allocation5 + $0x7c8] sm:$0xff]
    %v399 = vld [vmem:[#allocation5 + $0x7d0] sm:$0xff]
    %v400 = vld [vmem:[#allocation5 + $0x7d8] sm:$0xff]
    %v401 = vld [vmem:[#allocation5 + $0x7e0] sm:$0xff]
    %v402 = vld [vmem:[#allocation5 + $0x7e8] sm:$0xff]
    %v403 = vld [vmem:[#allocation5 + $0x7f0] sm:$0xff]
    %v404 = vld [vmem:[#allocation5 + $0x7f8] sm:$0xff]
    %v405 = vld [vmem:[#allocation5 + $0x800] sm:$0xff]
    %v406 = vld [vmem:[#allocation5 + $0x808] sm:$0xff]
    %v407 = vld [vmem:[#allocation5 + $0x810] sm:$0xff]
    %v408 = vld [vmem:[#allocation5 + $0x818] sm:$0xff]
    %v409 = vld [vmem:[#allocation5 + $0x820] sm:$0xff]
    %v410 = vld [vmem:[#allocation5 + $0x828] sm:$0xff]
    %v411 = vld [vmem:[#allocation5 + $0x830] sm:$0xff]
    %v412 = vld [vmem:[#allocation5 + $0x838] sm:$0xff]
    %v677 = vunpack.c.l.b16 %v149
    %v678 = vunpack.c.h.b16 %v149
    %v679 = vunpack.c.l.b16 %v150
    %v680 = vunpack.c.h.b16 %v150
    %v681 = vunpack.c.l.b16 %v151
    %v682 = vunpack.c.h.b16 %v151
    %v683 = vunpack.c.l.b16 %v152
    %v684 = vunpack.c.h.b16 %v152
    %v685 = vunpack.c.l.b16 %v153
    %v686 = vunpack.c.h.b16 %v153
    %v687 = vunpack.c.l.b16 %v154
    %v688 = vunpack.c.h.b16 %v154
    %v689 = vunpack.c.l.b16 %v155
    %v690 = vunpack.c.h.b16 %v155
    %v691 = vunpack.c.l.b16 %v156
    %v692 = vunpack.c.h.b16 %v156
    %v693 = vunpack.c.l.b16 %v157
    %v694 = vunpack.c.h.b16 %v157
    %v695 = vunpack.c.l.b16 %v158
    %v696 = vunpack.c.h.b16 %v158
    %v697 = vunpack.c.l.b16 %v159
    %v698 = vunpack.c.h.b16 %v159
    %v699 = vunpack.c.l.b16 %v160
    %v700 = vunpack.c.h.b16 %v160
    %v701 = vunpack.c.l.b16 %v161
    %v702 = vunpack.c.h.b16 %v161
    %v703 = vunpack.c.l.b16 %v162
    %v704 = vunpack.c.h.b16 %v162
    %v705 = vunpack.c.l.b16 %v163
    %v706 = vunpack.c.h.b16 %v163
    %v707 = vunpack.c.l.b16 %v164
    %v708 = vunpack.c.h.b16 %v164
    %v709 = vunpack.c.l.b16 %v165
    %v710 = vunpack.c.h.b16 %v165
    %v711 = vunpack.c.l.b16 %v166
    %v712 = vunpack.c.h.b16 %v166
    %v713 = vunpack.c.l.b16 %v167
    %v714 = vunpack.c.h.b16 %v167
    %v715 = vunpack.c.l.b16 %v168
    %v716 = vunpack.c.h.b16 %v168
    %v717 = vunpack.c.l.b16 %v169
    %v718 = vunpack.c.h.b16 %v169
    %v719 = vunpack.c.l.b16 %v170
    %v720 = vunpack.c.h.b16 %v170
    %v721 = vunpack.c.l.b16 %v171
    %v722 = vunpack.c.h.b16 %v171
    %v723 = vunpack.c.l.b16 %v172
    %v724 = vunpack.c.h.b16 %v172
    %v725 = vunpack.c.l.b16 %v173
    %v726 = vunpack.c.h.b16 %v173
    %v727 = vunpack.c.l.b16 %v174
    %v728 = vunpack.c.h.b16 %v174
    %v729 = vunpack.c.l.b16 %v175
    %v730 = vunpack.c.h.b16 %v175
    %v731 = vunpack.c.l.b16 %v176
    %v732 = vunpack.c.h.b16 %v176
    %v733 = vunpack.c.l.b16 %v177
    %v734 = vunpack.c.h.b16 %v177
    %v735 = vunpack.c.l.b16 %v178
    %v736 = vunpack.c.h.b16 %v178
    %v737 = vunpack.c.l.b16 %v179
    %v738 = vunpack.c.h.b16 %v179
    %v739 = vunpack.c.l.b16 %v180
    %v740 = vunpack.c.h.b16 %v180
    %v741 = vunpack.c.l.b16 %v181
    %v742 = vunpack.c.h.b16 %v181
    %v743 = vunpack.c.l.b16 %v182
    %v744 = vunpack.c.h.b16 %v182
    %v745 = vunpack.c.l.b16 %v183
    %v746 = vunpack.c.h.b16 %v183
    %v747 = vunpack.c.l.b16 %v184
    %v748 = vunpack.c.h.b16 %v184
    %v749 = vunpack.c.l.b16 %v185
    %v750 = vunpack.c.h.b16 %v185
    %v751 = vunpack.c.l.b16 %v186
    %v752 = vunpack.c.h.b16 %v186
    %v753 = vunpack.c.l.b16 %v187
    %v754 = vunpack.c.h.b16 %v187
    %v755 = vunpack.c.l.b16 %v188
    %v756 = vunpack.c.h.b16 %v188
    %v757 = vunpack.c.l.b16 %v189
    %v758 = vunpack.c.h.b16 %v189
    %v759 = vunpack.c.l.b16 %v190
    %v760 = vunpack.c.h.b16 %v190
    %v761 = vunpack.c.l.b16 %v191
    %v762 = vunpack.c.h.b16 %v191
    %v763 = vunpack.c.l.b16 %v192
    %v764 = vunpack.c.h.b16 %v192
    %v765 = vunpack.c.l.b16 %v193
    %v766 = vunpack.c.h.b16 %v193
    %v767 = vunpack.c.l.b16 %v194
    %v768 = vunpack.c.h.b16 %v194
    %v769 = vunpack.c.l.b16 %v195
    %v770 = vunpack.c.h.b16 %v195
    %v771 = vunpack.c.l.b16 %v196
    %v772 = vunpack.c.h.b16 %v196
    %v773 = vunpack.c.l.b16 %v197
    %v774 = vunpack.c.h.b16 %v197
    %v775 = vunpack.c.l.b16 %v198
    %v776 = vunpack.c.h.b16 %v198
    %v777 = vunpack.c.l.b16 %v199
    %v778 = vunpack.c.h.b16 %v199
    %v779 = vunpack.c.l.b16 %v200
    %v780 = vunpack.c.h.b16 %v200
    %v781 = vunpack.c.l.b16 %v201
    %v782 = vunpack.c.h.b16 %v201
    %v783 = vunpack.c.l.b16 %v202
    %v784 = vunpack.c.h.b16 %v202
    %v785 = vunpack.c.l.b16 %v203
    %v786 = vunpack.c.h.b16 %v203
    %v787 = vunpack.c.l.b16 %v204
    %v788 = vunpack.c.h.b16 %v204
    %v789 = vunpack.c.l.b16 %v205
    %v790 = vunpack.c.h.b16 %v205
    %v791 = vunpack.c.l.b16 %v206
    %v792 = vunpack.c.h.b16 %v206
    %v793 = vunpack.c.l.b16 %v207
    %v794 = vunpack.c.h.b16 %v207
    %v795 = vunpack.c.l.b16 %v208
    %v796 = vunpack.c.h.b16 %v208
    %v797 = vunpack.c.l.b16 %v209
    %v798 = vunpack.c.h.b16 %v209
    %v799 = vunpack.c.l.b16 %v210
    %v800 = vunpack.c.h.b16 %v210
    %v801 = vunpack.c.l.b16 %v211
    %v802 = vunpack.c.h.b16 %v211
    %v803 = vunpack.c.l.b16 %v212
    %v804 = vunpack.c.h.b16 %v212
    %v805 = vunpack.c.l.b16 %v213
    %v806 = vunpack.c.h.b16 %v213
    %v807 = vunpack.c.l.b16 %v214
    %v808 = vunpack.c.h.b16 %v214
    %v809 = vunpack.c.l.b16 %v215
    %v810 = vunpack.c.h.b16 %v215
    %v811 = vunpack.c.l.b16 %v216
    %v812 = vunpack.c.h.b16 %v216
    %v813 = vunpack.c.l.b16 %v217
    %v814 = vunpack.c.h.b16 %v217
    %v815 = vunpack.c.l.b16 %v218
    %v816 = vunpack.c.h.b16 %v218
    %v817 = vunpack.c.l.b16 %v219
    %v818 = vunpack.c.h.b16 %v219
    %v819 = vunpack.c.l.b16 %v220
    %v820 = vunpack.c.h.b16 %v220
    %v821 = vunpack.c.l.b16 %v221
    %v822 = vunpack.c.h.b16 %v221
    %v823 = vunpack.c.l.b16 %v222
    %v824 = vunpack.c.h.b16 %v222
    %v825 = vunpack.c.l.b16 %v223
    %v826 = vunpack.c.h.b16 %v223
    %v827 = vunpack.c.l.b16 %v224
    %v828 = vunpack.c.h.b16 %v224
    %v829 = vunpack.c.l.b16 %v225
    %v830 = vunpack.c.h.b16 %v225
    %v831 = vunpack.c.l.b16 %v226
    %v832 = vunpack.c.h.b16 %v226
    %v833 = vunpack.c.l.b16 %v227
    %v834 = vunpack.c.h.b16 %v227
    %v835 = vunpack.c.l.b16 %v228
    %v836 = vunpack.c.h.b16 %v228
    %v837 = vunpack.c.l.b16 %v229
    %v838 = vunpack.c.h.b16 %v229
    %v839 = vunpack.c.l.b16 %v230
    %v840 = vunpack.c.h.b16 %v230
    %v841 = vunpack.c.l.b16 %v231
    %v842 = vunpack.c.h.b16 %v231
    %v843 = vunpack.c.l.b16 %v232
    %v844 = vunpack.c.h.b16 %v232
    %v845 = vunpack.c.l.b16 %v233
    %v846 = vunpack.c.h.b16 %v233
    %v847 = vunpack.c.l.b16 %v234
    %v848 = vunpack.c.h.b16 %v234
    %v849 = vunpack.c.l.b16 %v235
    %v850 = vunpack.c.h.b16 %v235
    %v851 = vunpack.c.l.b16 %v236
    %v852 = vunpack.c.h.b16 %v236
    %v853 = vunpack.c.l.b16 %v237
    %v854 = vunpack.c.h.b16 %v237
    %v855 = vunpack.c.l.b16 %v238
    %v856 = vunpack.c.h.b16 %v238
    %v857 = vunpack.c.l.b16 %v239
    %v858 = vunpack.c.h.b16 %v239
    %v859 = vunpack.c.l.b16 %v240
    %v860 = vunpack.c.h.b16 %v240
    %v861 = vunpack.c.l.b16 %v241
    %v862 = vunpack.c.h.b16 %v241
    %v863 = vunpack.c.l.b16 %v242
    %v864 = vunpack.c.h.b16 %v242
    %v865 = vunpack.c.l.b16 %v243
    %v866 = vunpack.c.h.b16 %v243
    %v867 = vunpack.c.l.b16 %v244
    %v868 = vunpack.c.h.b16 %v244
    %v869 = vunpack.c.l.b16 %v245
    %v870 = vunpack.c.h.b16 %v245
    %v871 = vunpack.c.l.b16 %v246
    %v872 = vunpack.c.h.b16 %v246
    %v873 = vunpack.c.l.b16 %v247
    %v874 = vunpack.c.h.b16 %v247
    %v875 = vunpack.c.l.b16 %v248
    %v876 = vunpack.c.h.b16 %v248
    %v877 = vunpack.c.l.b16 %v249
    %v878 = vunpack.c.h.b16 %v249
    %v879 = vunpack.c.l.b16 %v250
    %v880 = vunpack.c.h.b16 %v250
    %v881 = vunpack.c.l.b16 %v251
    %v882 = vunpack.c.h.b16 %v251
    %v883 = vunpack.c.l.b16 %v252
    %v884 = vunpack.c.h.b16 %v252
    %v885 = vunpack.c.l.b16 %v253
    %v886 = vunpack.c.h.b16 %v253
    %v887 = vunpack.c.l.b16 %v254
    %v888 = vunpack.c.h.b16 %v254
    %v889 = vunpack.c.l.b16 %v255
    %v890 = vunpack.c.h.b16 %v255
    %v891 = vunpack.c.l.b16 %v256
    %v892 = vunpack.c.h.b16 %v256
    %v893 = vunpack.c.l.b16 %v257
    %v894 = vunpack.c.h.b16 %v257
    %v895 = vunpack.c.l.b16 %v258
    %v896 = vunpack.c.h.b16 %v258
    %v897 = vunpack.c.l.b16 %v259
    %v898 = vunpack.c.h.b16 %v259
    %v899 = vunpack.c.l.b16 %v260
    %v900 = vunpack.c.h.b16 %v260
    %v901 = vunpack.c.l.b16 %v261
    %v902 = vunpack.c.h.b16 %v261
    %v903 = vunpack.c.l.b16 %v262
    %v904 = vunpack.c.h.b16 %v262
    %v905 = vunpack.c.l.b16 %v263
    %v906 = vunpack.c.h.b16 %v263
    %v907 = vunpack.c.l.b16 %v264
    %v908 = vunpack.c.h.b16 %v264
    %v909 = vunpack.c.l.b16 %v265
    %v910 = vunpack.c.h.b16 %v265
    %v911 = vunpack.c.l.b16 %v266
    %v912 = vunpack.c.h.b16 %v266
    %v913 = vunpack.c.l.b16 %v267
    %v914 = vunpack.c.h.b16 %v267
    %v915 = vunpack.c.l.b16 %v268
    %v916 = vunpack.c.h.b16 %v268
    %v917 = vunpack.c.l.b16 %v269
    %v918 = vunpack.c.h.b16 %v269
    %v919 = vunpack.c.l.b16 %v270
    %v920 = vunpack.c.h.b16 %v270
    %v921 = vunpack.c.l.b16 %v271
    %v922 = vunpack.c.h.b16 %v271
    %v923 = vunpack.c.l.b16 %v272
    %v924 = vunpack.c.h.b16 %v272
    %v925 = vunpack.c.l.b16 %v273
    %v926 = vunpack.c.h.b16 %v273
    %v927 = vunpack.c.l.b16 %v274
    %v928 = vunpack.c.h.b16 %v274
    %v929 = vunpack.c.l.b16 %v275
    %v930 = vunpack.c.h.b16 %v275
    %v931 = vunpack.c.l.b16 %v276
    %v932 = vunpack.c.h.b16 %v276
    %v933 = vunpack.c.l.b16 %v277
    %v934 = vunpack.c.h.b16 %v277
    %v935 = vunpack.c.l.b16 %v278
    %v936 = vunpack.c.h.b16 %v278
    %v937 = vunpack.c.l.b16 %v279
    %v938 = vunpack.c.h.b16 %v279
    %v939 = vunpack.c.l.b16 %v280
    %v940 = vunpack.c.h.b16 %v280
    %v941 = vunpack.c.l.b16 %v281
    %v942 = vunpack.c.h.b16 %v281
    %v943 = vunpack.c.l.b16 %v282
    %v944 = vunpack.c.h.b16 %v282
    %v945 = vunpack.c.l.b16 %v283
    %v946 = vunpack.c.h.b16 %v283
    %v947 = vunpack.c.l.b16 %v284
    %v948 = vunpack.c.h.b16 %v284
    %v949 = vunpack.c.l.b16 %v285
    %v950 = vunpack.c.h.b16 %v285
    %v951 = vunpack.c.l.b16 %v286
    %v952 = vunpack.c.h.b16 %v286
    %v953 = vunpack.c.l.b16 %v287
    %v954 = vunpack.c.h.b16 %v287
    %v955 = vunpack.c.l.b16 %v288
    %v956 = vunpack.c.h.b16 %v288
    %v957 = vunpack.c.l.b16 %v289
    %v958 = vunpack.c.h.b16 %v289
    %v959 = vunpack.c.l.b16 %v290
    %v960 = vunpack.c.h.b16 %v290
    %v961 = vunpack.c.l.b16 %v291
    %v962 = vunpack.c.h.b16 %v291
    %v963 = vunpack.c.l.b16 %v292
    %v964 = vunpack.c.h.b16 %v292
    %v965 = vunpack.c.l.b16 %v293
    %v966 = vunpack.c.h.b16 %v293
    %v967 = vunpack.c.l.b16 %v294
    %v968 = vunpack.c.h.b16 %v294
    %v969 = vunpack.c.l.b16 %v295
    %v970 = vunpack.c.h.b16 %v295
    %v971 = vunpack.c.l.b16 %v296
    %v972 = vunpack.c.h.b16 %v296
    %v973 = vunpack.c.l.b16 %v297
    %v974 = vunpack.c.h.b16 %v297
    %v975 = vunpack.c.l.b16 %v298
    %v976 = vunpack.c.h.b16 %v298
    %v977 = vunpack.c.l.b16 %v299
    %v978 = vunpack.c.h.b16 %v299
    %v979 = vunpack.c.l.b16 %v300
    %v980 = vunpack.c.h.b16 %v300
    %v981 = vunpack.c.l.b16 %v301
    %v982 = vunpack.c.h.b16 %v301
    %v983 = vunpack.c.l.b16 %v302
    %v984 = vunpack.c.h.b16 %v302
    %v985 = vunpack.c.l.b16 %v303
    %v986 = vunpack.c.h.b16 %v303
    %v987 = vunpack.c.l.b16 %v304
    %v988 = vunpack.c.h.b16 %v304
    %v989 = vunpack.c.l.b16 %v305
    %v990 = vunpack.c.h.b16 %v305
    %v991 = vunpack.c.l.b16 %v306
    %v992 = vunpack.c.h.b16 %v306
    %v993 = vunpack.c.l.b16 %v307
    %v994 = vunpack.c.h.b16 %v307
    %v995 = vunpack.c.l.b16 %v308
    %v996 = vunpack.c.h.b16 %v308
    %v997 = vunpack.c.l.b16 %v309
    %v998 = vunpack.c.h.b16 %v309
    %v999 = vunpack.c.l.b16 %v310
    %v1000 = vunpack.c.h.b16 %v310
    %v1001 = vunpack.c.l.b16 %v311
    %v1002 = vunpack.c.h.b16 %v311
    %v1003 = vunpack.c.l.b16 %v312
    %v1004 = vunpack.c.h.b16 %v312
    %v1005 = vunpack.c.l.b16 %v313
    %v1006 = vunpack.c.h.b16 %v313
    %v1007 = vunpack.c.l.b16 %v314
    %v1008 = vunpack.c.h.b16 %v314
    %v1009 = vunpack.c.l.b16 %v315
    %v1010 = vunpack.c.h.b16 %v315
    %v1011 = vunpack.c.l.b16 %v316
    %v1012 = vunpack.c.h.b16 %v316
    %v1013 = vunpack.c.l.b16 %v317
    %v1014 = vunpack.c.h.b16 %v317
    %v1015 = vunpack.c.l.b16 %v318
    %v1016 = vunpack.c.h.b16 %v318
    %v1017 = vunpack.c.l.b16 %v319
    %v1018 = vunpack.c.h.b16 %v319
    %v1019 = vunpack.c.l.b16 %v320
    %v1020 = vunpack.c.h.b16 %v320
    %v1021 = vunpack.c.l.b16 %v321
    %v1022 = vunpack.c.h.b16 %v321
    %v1023 = vunpack.c.l.b16 %v322
    %v1024 = vunpack.c.h.b16 %v322
    %v1025 = vunpack.c.l.b16 %v323
    %v1026 = vunpack.c.h.b16 %v323
    %v1027 = vunpack.c.l.b16 %v324
    %v1028 = vunpack.c.h.b16 %v324
    %v1029 = vunpack.c.l.b16 %v325
    %v1030 = vunpack.c.h.b16 %v325
    %v1031 = vunpack.c.l.b16 %v326
    %v1032 = vunpack.c.h.b16 %v326
    %v1033 = vunpack.c.l.b16 %v327
    %v1034 = vunpack.c.h.b16 %v327
    %v1035 = vunpack.c.l.b16 %v328
    %v1036 = vunpack.c.h.b16 %v328
    %v1037 = vunpack.c.l.b16 %v329
    %v1038 = vunpack.c.h.b16 %v329
    %v1039 = vunpack.c.l.b16 %v330
    %v1040 = vunpack.c.h.b16 %v330
    %v1041 = vunpack.c.l.b16 %v331
    %v1042 = vunpack.c.h.b16 %v331
    %v1043 = vunpack.c.l.b16 %v332
    %v1044 = vunpack.c.h.b16 %v332
    %v1045 = vunpack.c.l.b16 %v333
    %v1046 = vunpack.c.h.b16 %v333
    %v1047 = vunpack.c.l.b16 %v334
    %v1048 = vunpack.c.h.b16 %v334
    %v1049 = vunpack.c.l.b16 %v335
    %v1050 = vunpack.c.h.b16 %v335
    %v1051 = vunpack.c.l.b16 %v336
    %v1052 = vunpack.c.h.b16 %v336
    %v1053 = vunpack.c.l.b16 %v337
    %v1054 = vunpack.c.h.b16 %v337
    %v1055 = vunpack.c.l.b16 %v338
    %v1056 = vunpack.c.h.b16 %v338
    %v1057 = vunpack.c.l.b16 %v339
    %v1058 = vunpack.c.h.b16 %v339
    %v1059 = vunpack.c.l.b16 %v340
    %v1060 = vunpack.c.h.b16 %v340
    %v1061 = vunpack.c.l.b16 %v341
    %v1062 = vunpack.c.h.b16 %v341
    %v1063 = vunpack.c.l.b16 %v342
    %v1064 = vunpack.c.h.b16 %v342
    %v1065 = vunpack.c.l.b16 %v343
    %v1066 = vunpack.c.h.b16 %v343
    %v1067 = vunpack.c.l.b16 %v344
    %v1068 = vunpack.c.h.b16 %v344
    %v1069 = vunpack.c.l.b16 %v345
    %v1070 = vunpack.c.h.b16 %v345
    %v1071 = vunpack.c.l.b16 %v346
    %v1072 = vunpack.c.h.b16 %v346
    %v1073 = vunpack.c.l.b16 %v347
    %v1074 = vunpack.c.h.b16 %v347
    %v1075 = vunpack.c.l.b16 %v348
    %v1076 = vunpack.c.h.b16 %v348
    %v1077 = vunpack.c.l.b16 %v349
    %v1078 = vunpack.c.h.b16 %v349
    %v1079 = vunpack.c.l.b16 %v350
    %v1080 = vunpack.c.h.b16 %v350
    %v1081 = vunpack.c.l.b16 %v351
    %v1082 = vunpack.c.h.b16 %v351
    %v1083 = vunpack.c.l.b16 %v352
    %v1084 = vunpack.c.h.b16 %v352
    %v1085 = vunpack.c.l.b16 %v353
    %v1086 = vunpack.c.h.b16 %v353
    %v1087 = vunpack.c.l.b16 %v354
    %v1088 = vunpack.c.h.b16 %v354
    %v1089 = vunpack.c.l.b16 %v355
    %v1090 = vunpack.c.h.b16 %v355
    %v1091 = vunpack.c.l.b16 %v356
    %v1092 = vunpack.c.h.b16 %v356
    %v1093 = vunpack.c.l.b16 %v357
    %v1094 = vunpack.c.h.b16 %v357
    %v1095 = vunpack.c.l.b16 %v358
    %v1096 = vunpack.c.h.b16 %v358
    %v1097 = vunpack.c.l.b16 %v359
    %v1098 = vunpack.c.h.b16 %v359
    %v1099 = vunpack.c.l.b16 %v360
    %v1100 = vunpack.c.h.b16 %v360
    %v1101 = vunpack.c.l.b16 %v361
    %v1102 = vunpack.c.h.b16 %v361
    %v1103 = vunpack.c.l.b16 %v362
    %v1104 = vunpack.c.h.b16 %v362
    %v1105 = vunpack.c.l.b16 %v363
    %v1106 = vunpack.c.h.b16 %v363
    %v1107 = vunpack.c.l.b16 %v364
    %v1108 = vunpack.c.h.b16 %v364
    %v1109 = vunpack.c.l.b16 %v365
    %v1110 = vunpack.c.h.b16 %v365
    %v1111 = vunpack.c.l.b16 %v366
    %v1112 = vunpack.c.h.b16 %v366
    %v1113 = vunpack.c.l.b16 %v367
    %v1114 = vunpack.c.h.b16 %v367
    %v1115 = vunpack.c.l.b16 %v368
    %v1116 = vunpack.c.h.b16 %v368
    %v1117 = vunpack.c.l.b16 %v369
    %v1118 = vunpack.c.h.b16 %v369
    %v1119 = vunpack.c.l.b16 %v370
    %v1120 = vunpack.c.h.b16 %v370
    %v1121 = vunpack.c.l.b16 %v371
    %v1122 = vunpack.c.h.b16 %v371
    %v1123 = vunpack.c.l.b16 %v372
    %v1124 = vunpack.c.h.b16 %v372
    %v1125 = vunpack.c.l.b16 %v373
    %v1126 = vunpack.c.h.b16 %v373
    %v1127 = vunpack.c.l.b16 %v374
    %v1128 = vunpack.c.h.b16 %v374
    %v1129 = vunpack.c.l.b16 %v375
    %v1130 = vunpack.c.h.b16 %v375
    %v1131 = vunpack.c.l.b16 %v376
    %v1132 = vunpack.c.h.b16 %v376
    %v1133 = vunpack.c.l.b16 %v377
    %v1134 = vunpack.c.h.b16 %v377
    %v1135 = vunpack.c.l.b16 %v378
    %v1136 = vunpack.c.h.b16 %v378
    %v1137 = vunpack.c.l.b16 %v379
    %v1138 = vunpack.c.h.b16 %v379
    %v1139 = vunpack.c.l.b16 %v380
    %v1140 = vunpack.c.h.b16 %v380
    %v1141 = vunpack.c.l.b16 %v381
    %v1142 = vunpack.c.h.b16 %v381
    %v1143 = vunpack.c.l.b16 %v382
    %v1144 = vunpack.c.h.b16 %v382
    %v1145 = vunpack.c.l.b16 %v383
    %v1146 = vunpack.c.h.b16 %v383
    %v1147 = vunpack.c.l.b16 %v384
    %v1148 = vunpack.c.h.b16 %v384
    %v1149 = vunpack.c.l.b16 %v385
    %v1150 = vunpack.c.h.b16 %v385
    %v1151 = vunpack.c.l.b16 %v386
    %v1152 = vunpack.c.h.b16 %v386
    %v1153 = vunpack.c.l.b16 %v387
    %v1154 = vunpack.c.h.b16 %v387
    %v1155 = vunpack.c.l.b16 %v388
    %v1156 = vunpack.c.h.b16 %v388
    %v1157 = vunpack.c.l.b16 %v389
    %v1158 = vunpack.c.h.b16 %v389
    %v1159 = vunpack.c.l.b16 %v390
    %v1160 = vunpack.c.h.b16 %v390
    %v1161 = vunpack.c.l.b16 %v391
    %v1162 = vunpack.c.h.b16 %v391
    %v1163 = vunpack.c.l.b16 %v392
    %v1164 = vunpack.c.h.b16 %v392
    %v1165 = vunpack.c.l.b16 %v393
    %v1166 = vunpack.c.h.b16 %v393
    %v1167 = vunpack.c.l.b16 %v394
    %v1168 = vunpack.c.h.b16 %v394
    %v1169 = vunpack.c.l.b16 %v395
    %v1170 = vunpack.c.h.b16 %v395
    %v1171 = vunpack.c.l.b16 %v396
    %v1172 = vunpack.c.h.b16 %v396
    %v1173 = vunpack.c.l.b16 %v397
    %v1174 = vunpack.c.h.b16 %v397
    %v1175 = vunpack.c.l.b16 %v398
    %v1176 = vunpack.c.h.b16 %v398
    %v1177 = vunpack.c.l.b16 %v399
    %v1178 = vunpack.c.h.b16 %v399
    %v1179 = vunpack.c.l.b16 %v400
    %v1180 = vunpack.c.h.b16 %v400
    %v1181 = vunpack.c.l.b16 %v401
    %v1182 = vunpack.c.h.b16 %v401
    %v1183 = vunpack.c.l.b16 %v402
    %v1184 = vunpack.c.h.b16 %v402
    %v1185 = vunpack.c.l.b16 %v403
    %v1186 = vunpack.c.h.b16 %v403
    %v1187 = vunpack.c.l.b16 %v404
    %v1188 = vunpack.c.h.b16 %v404
    %v1189 = vunpack.c.l.b16 %v405
    %v1190 = vunpack.c.h.b16 %v405
    %v1191 = vunpack.c.l.b16 %v406
    %v1192 = vunpack.c.h.b16 %v406
    %v1193 = vunpack.c.l.b16 %v407
    %v1194 = vunpack.c.h.b16 %v407
    %v1195 = vunpack.c.l.b16 %v408
    %v1196 = vunpack.c.h.b16 %v408
    %v1197 = vunpack.c.l.b16 %v409
    %v1198 = vunpack.c.h.b16 %v409
    %v1199 = vunpack.c.l.b16 %v410
    %v1200 = vunpack.c.h.b16 %v410
    %v1201 = vunpack.c.l.b16 %v411
    %v1202 = vunpack.c.h.b16 %v411
    %v1203 = vunpack.c.l.b16 %v412
    %v1204 = vunpack.c.h.b16 %v412
    %v1205 = vpack.c.b16 %v681, %v677
    %v1206 = vpack.c.b16 %v682, %v678
    %v1207 = vpack.c.b16 %v683, %v679
    %v1208 = vpack.c.b16 %v684, %v680
    %v1209 = vpack.c.b16 %v689, %v685
    %v1210 = vpack.c.b16 %v690, %v686
    %v1211 = vpack.c.b16 %v691, %v687
    %v1212 = vpack.c.b16 %v692, %v688
    %v1213 = vpack.c.b16 %v697, %v693
    %v1214 = vpack.c.b16 %v698, %v694
    %v1215 = vpack.c.b16 %v699, %v695
    %v1216 = vpack.c.b16 %v700, %v696
    %v1217 = vpack.c.b16 %v705, %v701
    %v1218 = vpack.c.b16 %v706, %v702
    %v1219 = vpack.c.b16 %v707, %v703
    %v1220 = vpack.c.b16 %v708, %v704
    %v1221 = vpack.c.b16 %v713, %v709
    %v1222 = vpack.c.b16 %v714, %v710
    %v1223 = vpack.c.b16 %v715, %v711
    %v1224 = vpack.c.b16 %v716, %v712
    %v1225 = vpack.c.b16 %v721, %v717
    %v1226 = vpack.c.b16 %v722, %v718
    %v1227 = vpack.c.b16 %v723, %v719
    %v1228 = vpack.c.b16 %v724, %v720
    %v1229 = vpack.c.b16 %v729, %v725
    %v1230 = vpack.c.b16 %v730, %v726
    %v1231 = vpack.c.b16 %v731, %v727
    %v1232 = vpack.c.b16 %v732, %v728
    %v1233 = vpack.c.b16 %v737, %v733
    %v1234 = vpack.c.b16 %v738, %v734
    %v1235 = vpack.c.b16 %v739, %v735
    %v1236 = vpack.c.b16 %v740, %v736
    %v1237 = vpack.c.b16 %v745, %v741
    %v1238 = vpack.c.b16 %v746, %v742
    %v1239 = vpack.c.b16 %v747, %v743
    %v1240 = vpack.c.b16 %v748, %v744
    %v1241 = vpack.c.b16 %v753, %v749
    %v1242 = vpack.c.b16 %v754, %v750
    %v1243 = vpack.c.b16 %v755, %v751
    %v1244 = vpack.c.b16 %v756, %v752
    %v1245 = vpack.c.b16 %v761, %v757
    %v1246 = vpack.c.b16 %v762, %v758
    %v1247 = vpack.c.b16 %v763, %v759
    %v1248 = vpack.c.b16 %v764, %v760
    %v1249 = vpack.c.b16 %v769, %v765
    %v1250 = vpack.c.b16 %v770, %v766
    %v1251 = vpack.c.b16 %v771, %v767
    %v1252 = vpack.c.b16 %v772, %v768
    %v1253 = vpack.c.b16 %v777, %v773
    %v1254 = vpack.c.b16 %v778, %v774
    %v1255 = vpack.c.b16 %v779, %v775
    %v1256 = vpack.c.b16 %v780, %v776
    %v1257 = vpack.c.b16 %v785, %v781
    %v1258 = vpack.c.b16 %v786, %v782
    %v1259 = vpack.c.b16 %v787, %v783
    %v1260 = vpack.c.b16 %v788, %v784
    %v1261 = vpack.c.b16 %v793, %v789
    %v1262 = vpack.c.b16 %v794, %v790
    %v1263 = vpack.c.b16 %v795, %v791
    %v1264 = vpack.c.b16 %v796, %v792
    %v1265 = vpack.c.b16 %v801, %v797
    %v1266 = vpack.c.b16 %v802, %v798
    %v1267 = vpack.c.b16 %v803, %v799
    %v1268 = vpack.c.b16 %v804, %v800
    %v1269 = vpack.c.b16 %v809, %v805
    %v1270 = vpack.c.b16 %v810, %v806
    %v1271 = vpack.c.b16 %v811, %v807
    %v1272 = vpack.c.b16 %v812, %v808
    %v1273 = vpack.c.b16 %v817, %v813
    %v1274 = vpack.c.b16 %v818, %v814
    %v1275 = vpack.c.b16 %v819, %v815
    %v1276 = vpack.c.b16 %v820, %v816
    %v1277 = vpack.c.b16 %v825, %v821
    %v1278 = vpack.c.b16 %v826, %v822
    %v1279 = vpack.c.b16 %v827, %v823
    %v1280 = vpack.c.b16 %v828, %v824
    %v1281 = vpack.c.b16 %v833, %v829
    %v1282 = vpack.c.b16 %v834, %v830
    %v1283 = vpack.c.b16 %v835, %v831
    %v1284 = vpack.c.b16 %v836, %v832
    %v1285 = vpack.c.b16 %v841, %v837
    %v1286 = vpack.c.b16 %v842, %v838
    %v1287 = vpack.c.b16 %v843, %v839
    %v1288 = vpack.c.b16 %v844, %v840
    %v1289 = vpack.c.b16 %v849, %v845
    %v1290 = vpack.c.b16 %v850, %v846
    %v1291 = vpack.c.b16 %v851, %v847
    %v1292 = vpack.c.b16 %v852, %v848
    %v1293 = vpack.c.b16 %v857, %v853
    %v1294 = vpack.c.b16 %v858, %v854
    %v1295 = vpack.c.b16 %v859, %v855
    %v1296 = vpack.c.b16 %v860, %v856
    %v1297 = vpack.c.b16 %v865, %v861
    %v1298 = vpack.c.b16 %v866, %v862
    %v1299 = vpack.c.b16 %v867, %v863
    %v1300 = vpack.c.b16 %v868, %v864
    %v1301 = vpack.c.b16 %v873, %v869
    %v1302 = vpack.c.b16 %v874, %v870
    %v1303 = vpack.c.b16 %v875, %v871
    %v1304 = vpack.c.b16 %v876, %v872
    %v1305 = vpack.c.b16 %v881, %v877
    %v1306 = vpack.c.b16 %v882, %v878
    %v1307 = vpack.c.b16 %v883, %v879
    %v1308 = vpack.c.b16 %v884, %v880
    %v1309 = vpack.c.b16 %v889, %v885
    %v1310 = vpack.c.b16 %v890, %v886
    %v1311 = vpack.c.b16 %v891, %v887
    %v1312 = vpack.c.b16 %v892, %v888
    %v1313 = vpack.c.b16 %v897, %v893
    %v1314 = vpack.c.b16 %v898, %v894
    %v1315 = vpack.c.b16 %v899, %v895
    %v1316 = vpack.c.b16 %v900, %v896
    %v1317 = vpack.c.b16 %v905, %v901
    %v1318 = vpack.c.b16 %v906, %v902
    %v1319 = vpack.c.b16 %v907, %v903
    %v1320 = vpack.c.b16 %v908, %v904
    %v1321 = vpack.c.b16 %v913, %v909
    %v1322 = vpack.c.b16 %v914, %v910
    %v1323 = vpack.c.b16 %v915, %v911
    %v1324 = vpack.c.b16 %v916, %v912
    %v1325 = vpack.c.b16 %v921, %v917
    %v1326 = vpack.c.b16 %v922, %v918
    %v1327 = vpack.c.b16 %v923, %v919
    %v1328 = vpack.c.b16 %v924, %v920
    %v1329 = vpack.c.b16 %v929, %v925
    %v1330 = vpack.c.b16 %v930, %v926
    %v1331 = vpack.c.b16 %v931, %v927
    %v1332 = vpack.c.b16 %v932, %v928
    %v1333 = vpack.c.b16 %v937, %v933
    %v1334 = vpack.c.b16 %v938, %v934
    %v1335 = vpack.c.b16 %v939, %v935
    %v1336 = vpack.c.b16 %v940, %v936
    %v1337 = vpack.c.b16 %v945, %v941
    %v1338 = vpack.c.b16 %v946, %v942
    %v1339 = vpack.c.b16 %v947, %v943
    %v1340 = vpack.c.b16 %v948, %v944
    %v1341 = vpack.c.b16 %v953, %v949
    %v1342 = vpack.c.b16 %v954, %v950
    %v1343 = vpack.c.b16 %v955, %v951
    %v1344 = vpack.c.b16 %v956, %v952
    %v1345 = vpack.c.b16 %v961, %v957
    %v1346 = vpack.c.b16 %v962, %v958
    %v1347 = vpack.c.b16 %v963, %v959
    %v1348 = vpack.c.b16 %v964, %v960
    %v1349 = vpack.c.b16 %v969, %v965
    %v1350 = vpack.c.b16 %v970, %v966
    %v1351 = vpack.c.b16 %v971, %v967
    %v1352 = vpack.c.b16 %v972, %v968
    %v1353 = vpack.c.b16 %v977, %v973
    %v1354 = vpack.c.b16 %v978, %v974
    %v1355 = vpack.c.b16 %v979, %v975
    %v1356 = vpack.c.b16 %v980, %v976
    %v1357 = vpack.c.b16 %v985, %v981
    %v1358 = vpack.c.b16 %v986, %v982
    %v1359 = vpack.c.b16 %v987, %v983
    %v1360 = vpack.c.b16 %v988, %v984
    %v1361 = vpack.c.b16 %v993, %v989
    %v1362 = vpack.c.b16 %v994, %v990
    %v1363 = vpack.c.b16 %v995, %v991
    %v1364 = vpack.c.b16 %v996, %v992
    %v1365 = vpack.c.b16 %v1001, %v997
    %v1366 = vpack.c.b16 %v1002, %v998
    %v1367 = vpack.c.b16 %v1003, %v999
    %v1368 = vpack.c.b16 %v1004, %v1000
    %v1369 = vpack.c.b16 %v1009, %v1005
    %v1370 = vpack.c.b16 %v1010, %v1006
    %v1371 = vpack.c.b16 %v1011, %v1007
    %v1372 = vpack.c.b16 %v1012, %v1008
    %v1373 = vpack.c.b16 %v1017, %v1013
    %v1374 = vpack.c.b16 %v1018, %v1014
    %v1375 = vpack.c.b16 %v1019, %v1015
    %v1376 = vpack.c.b16 %v1020, %v1016
    %v1377 = vpack.c.b16 %v1025, %v1021
    %v1378 = vpack.c.b16 %v1026, %v1022
    %v1379 = vpack.c.b16 %v1027, %v1023
    %v1380 = vpack.c.b16 %v1028, %v1024
    %v1381 = vpack.c.b16 %v1033, %v1029
    %v1382 = vpack.c.b16 %v1034, %v1030
    %v1383 = vpack.c.b16 %v1035, %v1031
    %v1384 = vpack.c.b16 %v1036, %v1032
    %v1385 = vpack.c.b16 %v1041, %v1037
    %v1386 = vpack.c.b16 %v1042, %v1038
    %v1387 = vpack.c.b16 %v1043, %v1039
    %v1388 = vpack.c.b16 %v1044, %v1040
    %v1389 = vpack.c.b16 %v1049, %v1045
    %v1390 = vpack.c.b16 %v1050, %v1046
    %v1391 = vpack.c.b16 %v1051, %v1047
    %v1392 = vpack.c.b16 %v1052, %v1048
    %v1393 = vpack.c.b16 %v1057, %v1053
    %v1394 = vpack.c.b16 %v1058, %v1054
    %v1395 = vpack.c.b16 %v1059, %v1055
    %v1396 = vpack.c.b16 %v1060, %v1056
    %v1397 = vpack.c.b16 %v1065, %v1061
    %v1398 = vpack.c.b16 %v1066, %v1062
    %v1399 = vpack.c.b16 %v1067, %v1063
    %v1400 = vpack.c.b16 %v1068, %v1064
    %v1401 = vpack.c.b16 %v1073, %v1069
    %v1402 = vpack.c.b16 %v1074, %v1070
    %v1403 = vpack.c.b16 %v1075, %v1071
    %v1404 = vpack.c.b16 %v1076, %v1072
    %v1405 = vpack.c.b16 %v1081, %v1077
    %v1406 = vpack.c.b16 %v1082, %v1078
    %v1407 = vpack.c.b16 %v1083, %v1079
    %v1408 = vpack.c.b16 %v1084, %v1080
    %v1409 = vpack.c.b16 %v1089, %v1085
    %v1410 = vpack.c.b16 %v1090, %v1086
    %v1411 = vpack.c.b16 %v1091, %v1087
    %v1412 = vpack.c.b16 %v1092, %v1088
    %v1413 = vpack.c.b16 %v1097, %v1093
    %v1414 = vpack.c.b16 %v1098, %v1094
    %v1415 = vpack.c.b16 %v1099, %v1095
    %v1416 = vpack.c.b16 %v1100, %v1096
    %v1417 = vpack.c.b16 %v1105, %v1101
    %v1418 = vpack.c.b16 %v1106, %v1102
    %v1419 = vpack.c.b16 %v1107, %v1103
    %v1420 = vpack.c.b16 %v1108, %v1104
    %v1421 = vpack.c.b16 %v1113, %v1109
    %v1422 = vpack.c.b16 %v1114, %v1110
    %v1423 = vpack.c.b16 %v1115, %v1111
    %v1424 = vpack.c.b16 %v1116, %v1112
    %v1425 = vpack.c.b16 %v1121, %v1117
    %v1426 = vpack.c.b16 %v1122, %v1118
    %v1427 = vpack.c.b16 %v1123, %v1119
    %v1428 = vpack.c.b16 %v1124, %v1120
    %v1429 = vpack.c.b16 %v1129, %v1125
    %v1430 = vpack.c.b16 %v1130, %v1126
    %v1431 = vpack.c.b16 %v1131, %v1127
    %v1432 = vpack.c.b16 %v1132, %v1128
    %v1433 = vpack.c.b16 %v1137, %v1133
    %v1434 = vpack.c.b16 %v1138, %v1134
    %v1435 = vpack.c.b16 %v1139, %v1135
    %v1436 = vpack.c.b16 %v1140, %v1136
    %v1437 = vpack.c.b16 %v1145, %v1141
    %v1438 = vpack.c.b16 %v1146, %v1142
    %v1439 = vpack.c.b16 %v1147, %v1143
    %v1440 = vpack.c.b16 %v1148, %v1144
    %v1441 = vpack.c.b16 %v1153, %v1149
    %v1442 = vpack.c.b16 %v1154, %v1150
    %v1443 = vpack.c.b16 %v1155, %v1151
    %v1444 = vpack.c.b16 %v1156, %v1152
    %v1445 = vpack.c.b16 %v1161, %v1157
    %v1446 = vpack.c.b16 %v1162, %v1158
    %v1447 = vpack.c.b16 %v1163, %v1159
    %v1448 = vpack.c.b16 %v1164, %v1160
    %v1449 = vpack.c.b16 %v1169, %v1165
    %v1450 = vpack.c.b16 %v1170, %v1166
    %v1451 = vpack.c.b16 %v1171, %v1167
    %v1452 = vpack.c.b16 %v1172, %v1168
    %v1453 = vpack.c.b16 %v1177, %v1173
    %v1454 = vpack.c.b16 %v1178, %v1174
    %v1455 = vpack.c.b16 %v1179, %v1175
    %v1456 = vpack.c.b16 %v1180, %v1176
    %v1457 = vpack.c.b16 %v1185, %v1181
    %v1458 = vpack.c.b16 %v1186, %v1182
    %v1459 = vpack.c.b16 %v1187, %v1183
    %v1460 = vpack.c.b16 %v1188, %v1184
    %v1461 = vpack.c.b16 %v1193, %v1189
    %v1462 = vpack.c.b16 %v1194, %v1190
    %v1463 = vpack.c.b16 %v1195, %v1191
    %v1464 = vpack.c.b16 %v1196, %v1192
    %v1465 = vpack.c.b16 %v1201, %v1197
    %v1466 = vpack.c.b16 %v1202, %v1198
    %v1467 = vpack.c.b16 %v1203, %v1199
    %v1468 = vpack.c.b16 %v1204, %v1200
    %vm1733 = vcmask 261120
    %v1735 = vsel %vm1733, %v148, 0
    %1737 = vmatprep.subr.bf16.mxu0 %v1206
    %1738 = vmatpush1.bf16.msra.mxu0 %v1205
    %1739 = vmatprep.subr.bf16.mxu0 %v1210
    %1740 = vmatpush1.bf16.msra.mxu0 %v1209
    %1741 = vmatprep.subr.bf16.mxu0 %v1214
    %1742 = vmatpush1.bf16.msra.mxu0 %v1213
    %1743 = vmatprep.subr.bf16.mxu0 %v1218
    %1744 = vmatpush1.bf16.msra.mxu0 %v1217
    %1745 = vmatprep.subr.bf16.mxu0 %v1222
    %1746 = vmatpush1.bf16.msra.mxu0 %v1221
    %1747 = vmatprep.subr.bf16.mxu0 %v1226
    %1748 = vmatpush1.bf16.msra.mxu0 %v1225
    %1749 = vmatprep.subr.bf16.mxu0 %v1230
    %1750 = vmatpush1.bf16.msra.mxu0 %v1229
    %1751 = vmatprep.subr.bf16.mxu0 %v1234
    %1752 = vmatpush1.bf16.msra.mxu0 %v1233
    %1753 = vmatprep.subr.bf16.mxu0 %v1238
    %1754 = vmatpush1.bf16.msra.mxu0 %v1237
    %1755 = vmatprep.subr.bf16.mxu0 %v1242
    %1756 = vmatpush1.bf16.msra.mxu0 %v1241
    %1757 = vmatprep.subr.bf16.mxu0 %v1246
    %1758 = vmatpush1.bf16.msra.mxu0 %v1245
    %1759 = vmatprep.subr.bf16.mxu0 %v1250
    %1760 = vmatpush1.bf16.msra.mxu0 %v1249
    %1761 = vmatprep.subr.bf16.mxu0 %v1254
    %1762 = vmatpush1.bf16.msra.mxu0 %v1253
    %1763 = vmatprep.subr.bf16.mxu0 %v1258
    %1764 = vmatpush1.bf16.msra.mxu0 %v1257
    %1765 = vmatprep.subr.bf16.mxu0 %v1262
    %1766 = vmatpush1.bf16.msra.mxu0 %v1261
    %1767 = vmatprep.subr.bf16.mxu0 %v1266
    %1768 = vmatpush1.bf16.msra.mxu0 %v1265
    %1769 = vmatprep.mubr.bf16.mxu0 %v141
    %1770 = vmatmul.mubr.bf16.gmra.mrb[0].mxu0 %v140
    %v1771 = vpop.f32.mrb[0].mxu0
    %v1772 = vadd.f32 0.0, %v1771
    %v1773 = vpop.f32.mrb[0].mxu0
    %v1774 = vadd.f32 0.0, %v1773
    %v1775 = vpop.f32.mrb[0].mxu0
    %v1776 = vpop.f32.mrb[0].mxu0
    %1777 = vdwg.mxu0
    %1778 = vmatprep.subr.bf16.mxu0 %v1270
    %1779 = vmatpush1.bf16.msra.mxu0 %v1269
    %1780 = vmatprep.subr.bf16.mxu0 %v1274
    %1781 = vmatpush1.bf16.msra.mxu0 %v1273
    %1782 = vmatprep.subr.bf16.mxu0 %v1278
    %1783 = vmatpush1.bf16.msra.mxu0 %v1277
    %1784 = vmatprep.subr.bf16.mxu0 %v1282
    %1785 = vmatpush1.bf16.msra.mxu0 %v1281
    %1786 = vmatprep.subr.bf16.mxu0 %v1286
    %1787 = vmatpush1.bf16.msra.mxu0 %v1285
    %1788 = vmatprep.subr.bf16.mxu0 %v1290
    %1789 = vmatpush1.bf16.msra.mxu0 %v1289
    %1790 = vmatprep.subr.bf16.mxu0 %v1294
    %1791 = vmatpush1.bf16.msra.mxu0 %v1293
    %1792 = vmatprep.subr.bf16.mxu0 %v1298
    %1793 = vmatpush1.bf16.msra.mxu0 %v1297
    %1794 = vmatprep.subr.bf16.mxu0 %v1302
    %1795 = vmatpush1.bf16.msra.mxu0 %v1301
    %1796 = vmatprep.subr.bf16.mxu0 %v1306
    %1797 = vmatpush1.bf16.msra.mxu0 %v1305
    %1798 = vmatprep.subr.bf16.mxu0 %v1310
    %1799 = vmatpush1.bf16.msra.mxu0 %v1309
    %1800 = vmatprep.subr.bf16.mxu0 %v1314
    %1801 = vmatpush1.bf16.msra.mxu0 %v1313
    %1802 = vmatprep.subr.bf16.mxu0 %v1318
    %1803 = vmatpush1.bf16.msra.mxu0 %v1317
    %1804 = vmatprep.subr.bf16.mxu0 %v1322
    %1805 = vmatpush1.bf16.msra.mxu0 %v1321
    %1806 = vmatprep.subr.bf16.mxu0 %v1326
    %1807 = vmatpush1.bf16.msra.mxu0 %v1325
    %1808 = vmatprep.subr.bf16.mxu0 %v1330
    %1809 = vmatpush1.bf16.msra.mxu0 %v1329
    %1810 = vmatprep.mubr.bf16.mxu0 %v143
    %1811 = vmatmul.mubr.bf16.gmra.mrb[0].mxu0 %v142
    %v1812 = vpop.f32.mrb[0].mxu0
    %v1813 = vadd.f32 %v1772, %v1812
    %v1814 = vpop.f32.mrb[0].mxu0
    %v1815 = vadd.f32 %v1774, %v1814
    %v1816 = vpop.f32.mrb[0].mxu0
    %v1817 = vpop.f32.mrb[0].mxu0
    %1818 = vdwg.mxu0
    %1819 = vmatprep.subr.bf16.mxu0 %v1334
    %1820 = vmatpush1.bf16.msra.mxu0 %v1333
    %1821 = vmatprep.subr.bf16.mxu0 %v1338
    %1822 = vmatpush1.bf16.msra.mxu0 %v1337
    %1823 = vmatprep.subr.bf16.mxu0 %v1342
    %1824 = vmatpush1.bf16.msra.mxu0 %v1341
    %1825 = vmatprep.subr.bf16.mxu0 %v1346
    %1826 = vmatpush1.bf16.msra.mxu0 %v1345
    %1827 = vmatprep.subr.bf16.mxu0 %v1350
    %1828 = vmatpush1.bf16.msra.mxu0 %v1349
    %1829 = vmatprep.subr.bf16.mxu0 %v1354
    %1830 = vmatpush1.bf16.msra.mxu0 %v1353
    %1831 = vmatprep.subr.bf16.mxu0 %v1358
    %1832 = vmatpush1.bf16.msra.mxu0 %v1357
    %1833 = vmatprep.subr.bf16.mxu0 %v1362
    %1834 = vmatpush1.bf16.msra.mxu0 %v1361
    %1835 = vmatprep.subr.bf16.mxu0 %v1366
    %1836 = vmatpush1.bf16.msra.mxu0 %v1365
    %1837 = vmatprep.subr.bf16.mxu0 %v1370
    %1838 = vmatpush1.bf16.msra.mxu0 %v1369
    %1839 = vmatprep.subr.bf16.mxu0 %v1374
    %1840 = vmatpush1.bf16.msra.mxu0 %v1373
    %1841 = vmatprep.subr.bf16.mxu0 %v1378
    %1842 = vmatpush1.bf16.msra.mxu0 %v1377
    %1843 = vmatprep.subr.bf16.mxu0 %v1382
    %1844 = vmatpush1.bf16.msra.mxu0 %v1381
    %1845 = vmatprep.subr.bf16.mxu0 %v1386
    %1846 = vmatpush1.bf16.msra.mxu0 %v1385
    %1847 = vmatprep.subr.bf16.mxu0 %v1390
    %1848 = vmatpush1.bf16.msra.mxu0 %v1389
    %1849 = vmatprep.subr.bf16.mxu0 %v1394
    %1850 = vmatpush1.bf16.msra.mxu0 %v1393
    %1851 = vmatprep.mubr.bf16.mxu0 %v145
    %1852 = vmatmul.mubr.bf16.gmra.mrb[0].mxu0 %v144
    %v1853 = vpop.f32.mrb[0].mxu0
    %v1854 = vadd.f32 %v1813, %v1853
    %v1855 = vpop.f32.mrb[0].mxu0
    %v1856 = vadd.f32 %v1815, %v1855
    %v1857 = vpop.f32.mrb[0].mxu0
    %v1858 = vpop.f32.mrb[0].mxu0
    %1859 = vdwg.mxu0
    %1860 = vmatprep.subr.bf16.mxu0 %v1398
    %1861 = vmatpush1.bf16.msra.mxu0 %v1397
    %1862 = vmatprep.subr.bf16.mxu0 %v1402
    %1863 = vmatpush1.bf16.msra.mxu0 %v1401
    %1864 = vmatprep.subr.bf16.mxu0 %v1406
    %1865 = vmatpush1.bf16.msra.mxu0 %v1405
    %1866 = vmatprep.subr.bf16.mxu0 %v1410
    %1867 = vmatpush1.bf16.msra.mxu0 %v1409
    %1868 = vmatprep.subr.bf16.mxu0 %v1414
    %1869 = vmatpush1.bf16.msra.mxu0 %v1413
    %1870 = vmatprep.subr.bf16.mxu0 %v1418
    %1871 = vmatpush1.bf16.msra.mxu0 %v1417
    %1872 = vmatprep.subr.bf16.mxu0 %v1422
    %1873 = vmatpush1.bf16.msra.mxu0 %v1421
    %1874 = vmatprep.subr.bf16.mxu0 %v1426
    %1875 = vmatpush1.bf16.msra.mxu0 %v1425
    %1876 = vmatprep.subr.bf16.mxu0 %v1430
    %1877 = vmatpush1.bf16.msra.mxu0 %v1429
    %1878 = vmatprep.subr.bf16.mxu0 %v1434
    %1879 = vmatpush1.bf16.msra.mxu0 %v1433
    %1880 = vmatprep.subr.bf16.mxu0 %v1438
    %1881 = vmatpush1.bf16.msra.mxu0 %v1437
    %1882 = vmatprep.subr.bf16.mxu0 %v1442
    %1883 = vmatpush1.bf16.msra.mxu0 %v1441
    %1884 = vmatprep.subr.bf16.mxu0 %v1446
    %1885 = vmatpush1.bf16.msra.mxu0 %v1445
    %1886 = vmatprep.subr.bf16.mxu0 %v1450
    %1887 = vmatpush1.bf16.msra.mxu0 %v1449
    %1888 = vmatprep.subr.bf16.mxu0 %v1454
    %1889 = vmatpush1.bf16.msra.mxu0 %v1453
    %1890 = vmatprep.subr.bf16.mxu0 %v1458
    %1891 = vmatpush1.bf16.msra.mxu0 %v1457
    %1892 = vmatprep.mubr.bf16.mxu0 %v147
    %1893 = vmatmul.mubr.bf16.gmra.mrb[0].mxu0 %v146
    %v1894 = vpop.f32.mrb[0].mxu0
    %v1895 = vadd.f32 %v1854, %v1894
    %v1896 = vpop.f32.mrb[0].mxu0
    %v1897 = vadd.f32 %v1856, %v1896
    %v1898 = vpop.f32.mrb[0].mxu0
    %v1899 = vpop.f32.mrb[0].mxu0
    %1900 = vdwg.mxu0
    %1901 = vmatprep.subr.bf16.mxu0 %v1462
    %1902 = vmatpush1.bf16.msra.mxu0 %v1461
    %1903 = vmatprep.subr.bf16.mxu0 %v1466
    %1904 = vmatpush1.bf16.msra.mxu0 %v1465
    %1905 = vmatprep.subr.bf16.mxu0 0
    %1906 = vmatpush1.bf16.msra.mxu0 0
    %1907 = vmatprep.subr.bf16.mxu0 0
    %1908 = vmatpush1.bf16.msra.mxu0 0
    %1909 = vmatprep.subr.bf16.mxu0 0
    %1910 = vmatpush1.bf16.msra.mxu0 0
    %1911 = vmatprep.subr.bf16.mxu0 0
    %1912 = vmatpush1.bf16.msra.mxu0 0
    %1913 = vmatprep.subr.bf16.mxu0 0
    %1914 = vmatpush1.bf16.msra.mxu0 0
    %1915 = vmatprep.subr.bf16.mxu0 0
    %1916 = vmatpush1.bf16.msra.mxu0 0
    %1917 = vmatprep.subr.bf16.mxu0 0
    %1918 = vmatpush1.bf16.msra.mxu0 0
    %1919 = vmatprep.subr.bf16.mxu0 0
    %1920 = vmatpush1.bf16.msra.mxu0 0
    %1921 = vmatprep.subr.bf16.mxu0 0
    %1922 = vmatpush1.bf16.msra.mxu0 0
    %1923 = vmatprep.subr.bf16.mxu0 0
    %1924 = vmatpush1.bf16.msra.mxu0 0
    %1925 = vmatprep.subr.bf16.mxu0 0
    %1926 = vmatpush1.bf16.msra.mxu0 0
    %1927 = vmatprep.subr.bf16.mxu0 0
    %1928 = vmatpush1.bf16.msra.mxu0 0
    %1929 = vmatprep.subr.bf16.mxu0 0
    %1930 = vmatpush1.bf16.msra.mxu0 0
    %1931 = vmatprep.subr.bf16.mxu0 0
    %1932 = vmatpush1.bf16.msra.mxu0 0
    %1933 = vmatprep.mubr.bf16.mxu0 0
    %1934 = vmatmul.mubr.bf16.gmra.mrb[0].mxu0 %v1735
    %v1935 = vpop.f32.mrb[0].mxu0
    %v1936 = vadd.f32 %v1895, %v1935
    %v1937 = vpop.f32.mrb[0].mxu0
    %v1938 = vadd.f32 %v1897, %v1937
    %v1939 = vpop.f32.mrb[0].mxu0
    %v1940 = vpop.f32.mrb[0].mxu0
    %1941 = vdwg.mxu0
    %1942 = vmatprep.subr.bf16.mxu0 %v1208
    %1943 = vmatpush1.bf16.msra.mxu0 %v1207
    %1944 = vmatprep.subr.bf16.mxu0 %v1212
    %1945 = vmatpush1.bf16.msra.mxu0 %v1211
    %1946 = vmatprep.subr.bf16.mxu0 %v1216
    %1947 = vmatpush1.bf16.msra.mxu0 %v1215
    %1948 = vmatprep.subr.bf16.mxu0 %v1220
    %1949 = vmatpush1.bf16.msra.mxu0 %v1219
    %1950 = vmatprep.subr.bf16.mxu0 %v1224
    %1951 = vmatpush1.bf16.msra.mxu0 %v1223
    %1952 = vmatprep.subr.bf16.mxu0 %v1228
    %1953 = vmatpush1.bf16.msra.mxu0 %v1227
    %1954 = vmatprep.subr.bf16.mxu0 %v1232
    %1955 = vmatpush1.bf16.msra.mxu0 %v1231
    %1956 = vmatprep.subr.bf16.mxu0 %v1236
    %1957 = vmatpush1.bf16.msra.mxu0 %v1235
    %1958 = vmatprep.subr.bf16.mxu0 %v1240
    %1959 = vmatpush1.bf16.msra.mxu0 %v1239
    %1960 = vmatprep.subr.bf16.mxu0 %v1244
    %1961 = vmatpush1.bf16.msra.mxu0 %v1243
    %1962 = vmatprep.subr.bf16.mxu0 %v1248
    %1963 = vmatpush1.bf16.msra.mxu0 %v1247
    %1964 = vmatprep.subr.bf16.mxu0 %v1252
    %1965 = vmatpush1.bf16.msra.mxu0 %v1251
    %1966 = vmatprep.subr.bf16.mxu0 %v1256
    %1967 = vmatpush1.bf16.msra.mxu0 %v1255
    %1968 = vmatprep.subr.bf16.mxu0 %v1260
    %1969 = vmatpush1.bf16.msra.mxu0 %v1259
    %1970 = vmatprep.subr.bf16.mxu0 %v1264
    %1971 = vmatpush1.bf16.msra.mxu0 %v1263
    %1972 = vmatprep.subr.bf16.mxu0 %v1268
    %1973 = vmatpush1.bf16.msra.mxu0 %v1267
    %1974 = vmatprep.mubr.bf16.mxu0 %v141
    %1975 = vmatmul.mubr.bf16.gmra.mrb[0].mxu0 %v140
    %v1976 = vpop.f32.mrb[0].mxu0
    %v1977 = vadd.f32 0.0, %v1976
    %v1978 = vpop.f32.mrb[0].mxu0
    %v1979 = vadd.f32 0.0, %v1978
    %v1980 = vpop.f32.mrb[0].mxu0
    %v1981 = vpop.f32.mrb[0].mxu0
    %1982 = vdwg.mxu0
    %1983 = vmatprep.subr.bf16.mxu0 %v1272
    %1984 = vmatpush1.bf16.msra.mxu0 %v1271
    %1985 = vmatprep.subr.bf16.mxu0 %v1276
    %1986 = vmatpush1.bf16.msra.mxu0 %v1275
    %1987 = vmatprep.subr.bf16.mxu0 %v1280
    %1988 = vmatpush1.bf16.msra.mxu0 %v1279
    %1989 = vmatprep.subr.bf16.mxu0 %v1284
    %1990 = vmatpush1.bf16.msra.mxu0 %v1283
    %1991 = vmatprep.subr.bf16.mxu0 %v1288
    %1992 = vmatpush1.bf16.msra.mxu0 %v1287
    %1993 = vmatprep.subr.bf16.mxu0 %v1292
    %1994 = vmatpush1.bf16.msra.mxu0 %v1291
    %1995 = vmatprep.subr.bf16.mxu0 %v1296
    %1996 = vmatpush1.bf16.msra.mxu0 %v1295
    %1997 = vmatprep.subr.bf16.mxu0 %v1300
    %1998 = vmatpush1.bf16.msra.mxu0 %v1299
    %1999 = vmatprep.subr.bf16.mxu0 %v1304
    %2000 = vmatpush1.bf16.msra.mxu0 %v1303
    %2001 = vmatprep.subr.bf16.mxu0 %v1308
    %2002 = vmatpush1.bf16.msra.mxu0 %v1307
    %2003 = vmatprep.subr.bf16.mxu0 %v1312
    %2004 = vmatpush1.bf16.msra.mxu0 %v1311
    %2005 = vmatprep.subr.bf16.mxu0 %v1316
    %2006 = vmatpush1.bf16.msra.mxu0 %v1315
    %2007 = vmatprep.subr.bf16.mxu0 %v1320
    %2008 = vmatpush1.bf16.msra.mxu0 %v1319
    %2009 = vmatprep.subr.bf16.mxu0 %v1324
    %2010 = vmatpush1.bf16.msra.mxu0 %v1323
    %2011 = vmatprep.subr.bf16.mxu0 %v1328
    %2012 = vmatpush1.bf16.msra.mxu0 %v1327
    %2013 = vmatprep.subr.bf16.mxu0 %v1332
    %2014 = vmatpush1.bf16.msra.mxu0 %v1331
    %2015 = vmatprep.mubr.bf16.mxu0 %v143
    %2016 = vmatmul.mubr.bf16.gmra.mrb[0].mxu0 %v142
    %v2017 = vpop.f32.mrb[0].mxu0
    %v2018 = vadd.f32 %v1977, %v2017
    %v2019 = vpop.f32.mrb[0].mxu0
    %v2020 = vadd.f32 %v1979, %v2019
    %v2021 = vpop.f32.mrb[0].mxu0
    %v2022 = vpop.f32.mrb[0].mxu0
    %2023 = vdwg.mxu0
    %2024 = vmatprep.subr.bf16.mxu0 %v1336
    %2025 = vmatpush1.bf16.msra.mxu0 %v1335
    %2026 = vmatprep.subr.bf16.mxu0 %v1340
    %2027 = vmatpush1.bf16.msra.mxu0 %v1339
    %2028 = vmatprep.subr.bf16.mxu0 %v1344
    %2029 = vmatpush1.bf16.msra.mxu0 %v1343
    %2030 = vmatprep.subr.bf16.mxu0 %v1348
    %2031 = vmatpush1.bf16.msra.mxu0 %v1347
    %2032 = vmatprep.subr.bf16.mxu0 %v1352
    %2033 = vmatpush1.bf16.msra.mxu0 %v1351
    %2034 = vmatprep.subr.bf16.mxu0 %v1356
    %2035 = vmatpush1.bf16.msra.mxu0 %v1355
    %2036 = vmatprep.subr.bf16.mxu0 %v1360
    %2037 = vmatpush1.bf16.msra.mxu0 %v1359
    %2038 = vmatprep.subr.bf16.mxu0 %v1364
    %2039 = vmatpush1.bf16.msra.mxu0 %v1363
    %2040 = vmatprep.subr.bf16.mxu0 %v1368
    %2041 = vmatpush1.bf16.msra.mxu0 %v1367
    %2042 = vmatprep.subr.bf16.mxu0 %v1372
    %2043 = vmatpush1.bf16.msra.mxu0 %v1371
    %2044 = vmatprep.subr.bf16.mxu0 %v1376
    %2045 = vmatpush1.bf16.msra.mxu0 %v1375
    %2046 = vmatprep.subr.bf16.mxu0 %v1380
    %2047 = vmatpush1.bf16.msra.mxu0 %v1379
    %2048 = vmatprep.subr.bf16.mxu0 %v1384
    %2049 = vmatpush1.bf16.msra.mxu0 %v1383
    %2050 = vmatprep.subr.bf16.mxu0 %v1388
    %2051 = vmatpush1.bf16.msra.mxu0 %v1387
    %2052 = vmatprep.subr.bf16.mxu0 %v1392
    %2053 = vmatpush1.bf16.msra.mxu0 %v1391
    %2054 = vmatprep.subr.bf16.mxu0 %v1396
    %2055 = vmatpush1.bf16.msra.mxu0 %v1395
    %2056 = vmatprep.mubr.bf16.mxu0 %v145
    %2057 = vmatmul.mubr.bf16.gmra.mrb[0].mxu0 %v144
    %v2058 = vpop.f32.mrb[0].mxu0
    %v2059 = vadd.f32 %v2018, %v2058
    %v2060 = vpop.f32.mrb[0].mxu0
    %v2061 = vadd.f32 %v2020, %v2060
    %v2062 = vpop.f32.mrb[0].mxu0
    %v2063 = vpop.f32.mrb[0].mxu0
    %2064 = vdwg.mxu0
    %2065 = vmatprep.subr.bf16.mxu0 %v1400
    %2066 = vmatpush1.bf16.msra.mxu0 %v1399
    %2067 = vmatprep.subr.bf16.mxu0 %v1404
    %2068 = vmatpush1.bf16.msra.mxu0 %v1403
    %2069 = vmatprep.subr.bf16.mxu0 %v1408
    %2070 = vmatpush1.bf16.msra.mxu0 %v1407
    %2071 = vmatprep.subr.bf16.mxu0 %v1412
    %2072 = vmatpush1.bf16.msra.mxu0 %v1411
    %2073 = vmatprep.subr.bf16.mxu0 %v1416
    %2074 = vmatpush1.bf16.msra.mxu0 %v1415
    %2075 = vmatprep.subr.bf16.mxu0 %v1420
    %2076 = vmatpush1.bf16.msra.mxu0 %v1419
    %2077 = vmatprep.subr.bf16.mxu0 %v1424
    %2078 = vmatpush1.bf16.msra.mxu0 %v1423
    %2079 = vmatprep.subr.bf16.mxu0 %v1428
    %2080 = vmatpush1.bf16.msra.mxu0 %v1427
    %2081 = vmatprep.subr.bf16.mxu0 %v1432
    %2082 = vmatpush1.bf16.msra.mxu0 %v1431
    %2083 = vmatprep.subr.bf16.mxu0 %v1436
    %2084 = vmatpush1.bf16.msra.mxu0 %v1435
    %2085 = vmatprep.subr.bf16.mxu0 %v1440
    %2086 = vmatpush1.bf16.msra.mxu0 %v1439
    %2087 = vmatprep.subr.bf16.mxu0 %v1444
    %2088 = vmatpush1.bf16.msra.mxu0 %v1443
    %2089 = vmatprep.subr.bf16.mxu0 %v1448
    %2090 = vmatpush1.bf16.msra.mxu0 %v1447
    %2091 = vmatprep.subr.bf16.mxu0 %v1452
    %2092 = vmatpush1.bf16.msra.mxu0 %v1451
    %2093 = vmatprep.subr.bf16.mxu0 %v1456
    %2094 = vmatpush1.bf16.msra.mxu0 %v1455
    %2095 = vmatprep.subr.bf16.mxu0 %v1460
    %2096 = vmatpush1.bf16.msra.mxu0 %v1459
    %2097 = vmatprep.mubr.bf16.mxu0 %v147
    %2098 = vmatmul.mubr.bf16.gmra.mrb[0].mxu0 %v146
    %v2099 = vpop.f32.mrb[0].mxu0
    %v2100 = vadd.f32 %v2059, %v2099
    %v2101 = vpop.f32.mrb[0].mxu0
    %v2102 = vadd.f32 %v2061, %v2101
    %v2103 = vpop.f32.mrb[0].mxu0
    %v2104 = vpop.f32.mrb[0].mxu0
    %2105 = vdwg.mxu0
    %2106 = vmatprep.subr.bf16.mxu0 %v1464
    %2107 = vmatpush1.bf16.msra.mxu0 %v1463
    %2108 = vmatprep.subr.bf16.mxu0 %v1468
    %2109 = vmatpush1.bf16.msra.mxu0 %v1467
    %2110 = vmatprep.subr.bf16.mxu0 0
    %2111 = vmatpush1.bf16.msra.mxu0 0
    %2112 = vmatprep.subr.bf16.mxu0 0
    %2113 = vmatpush1.bf16.msra.mxu0 0
    %2114 = vmatprep.subr.bf16.mxu0 0
    %2115 = vmatpush1.bf16.msra.mxu0 0
    %2116 = vmatprep.subr.bf16.mxu0 0
    %2117 = vmatpush1.bf16.msra.mxu0 0
    %2118 = vmatprep.subr.bf16.mxu0 0
    %2119 = vmatpush1.bf16.msra.mxu0 0
    %2120 = vmatprep.subr.bf16.mxu0 0
    %2121 = vmatpush1.bf16.msra.mxu0 0
    %2122 = vmatprep.subr.bf16.mxu0 0
    %2123 = vmatpush1.bf16.msra.mxu0 0
    %2124 = vmatprep.subr.bf16.mxu0 0
    %2125 = vmatpush1.bf16.msra.mxu0 0
    %2126 = vmatprep.subr.bf16.mxu0 0
    %2127 = vmatpush1.bf16.msra.mxu0 0
    %2128 = vmatprep.subr.bf16.mxu0 0
    %2129 = vmatpush1.bf16.msra.mxu0 0
    %2130 = vmatprep.subr.bf16.mxu0 0
    %2131 = vmatpush1.bf16.msra.mxu0 0
    %2132 = vmatprep.subr.bf16.mxu0 0
    %2133 = vmatpush1.bf16.msra.mxu0 0
    %2134 = vmatprep.subr.bf16.mxu0 0
    %2135 = vmatpush1.bf16.msra.mxu0 0
    %2136 = vmatprep.subr.bf16.mxu0 0
    %2137 = vmatpush1.bf16.msra.mxu0 0
    %2138 = vmatprep.mubr.bf16.mxu0 0
    %2139 = vmatmul.mubr.bf16.gmra.mrb[0].mxu0 %v1735
    %v2140 = vpop.f32.mrb[0].mxu0
    %v2141 = vadd.f32 %v2100, %v2140
    %v2142 = vpop.f32.mrb[0].mxu0
    %v2143 = vadd.f32 %v2102, %v2142
    %v2144 = vpop.f32.mrb[0].mxu0
    %v2145 = vpop.f32.mrb[0].mxu0
    %2146 = vdwg.mxu0
    %v2147 = vrot.slane %v1936, 4
    %v2148 = vadd.f32 %v1936, %v2147
    %v2149 = vrot.slane %v2148, 2
    %v2150 = vadd.f32 %v2148, %v2149
    %v2151 = vrot.slane %v2150, 1
    %v2152 = vadd.f32 %v2150, %v2151
    %v2153 = vrot.slane %v1938, 4
    %v2154 = vadd.f32 %v1938, %v2153
    %v2155 = vrot.slane %v2154, 2
    %v2156 = vadd.f32 %v2154, %v2155
    %v2157 = vrot.slane %v2156, 1
    %v2158 = vadd.f32 %v2156, %v2157
    %v2159 = vrot.slane %v2141, 4
    %v2160 = vadd.f32 %v2141, %v2159
    %v2161 = vrot.slane %v2160, 2
    %v2162 = vadd.f32 %v2160, %v2161
    %v2163 = vrot.slane %v2162, 1
    %v2164 = vadd.f32 %v2162, %v2163
    %v2165 = vrot.slane %v2143, 4
    %v2166 = vadd.f32 %v2143, %v2165
    %v2167 = vrot.slane %v2166, 2
    %v2168 = vadd.f32 %v2166, %v2167
    %v2169 = vrot.slane %v2168, 1
    %v2170 = vadd.f32 %v2168, %v2169
    %v2171 = vmul.f32 %v2152, 0.125
    %v2172 = vmul.f32 %v2158, 0.125
    %v2173 = vmul.f32 %v2164, 0.125
    %v2174 = vmul.f32 %v2170, 0.125
    %v2175 = vmul.f32 %v1936, %v1936
    %v2176 = vmul.f32 %v1938, %v1938
    %v2177 = vmul.f32 %v2141, %v2141
    %v2178 = vmul.f32 %v2143, %v2143
    %v2179 = vrot.slane %v2175, 4
    %v2180 = vadd.f32 %v2175, %v2179
    %v2181 = vrot.slane %v2180, 2
    %v2182 = vadd.f32 %v2180, %v2181
    %v2183 = vrot.slane %v2182, 1
    %v2184 = vadd.f32 %v2182, %v2183
    %v2185 = vrot.slane %v2176, 4
    %v2186 = vadd.f32 %v2176, %v2185
    %v2187 = vrot.slane %v2186, 2
    %v2188 = vadd.f32 %v2186, %v2187
    %v2189 = vrot.slane %v2188, 1
    %v2190 = vadd.f32 %v2188, %v2189
    %v2191 = vrot.slane %v2177, 4
    %v2192 = vadd.f32 %v2177, %v2191
    %v2193 = vrot.slane %v2192, 2
    %v2194 = vadd.f32 %v2192, %v2193
    %v2195 = vrot.slane %v2194, 1
    %v2196 = vadd.f32 %v2194, %v2195
    %v2197 = vrot.slane %v2178, 4
    %v2198 = vadd.f32 %v2178, %v2197
    %v2199 = vrot.slane %v2198, 2
    %v2200 = vadd.f32 %v2198, %v2199
    %v2201 = vrot.slane %v2200, 1
    %v2202 = vadd.f32 %v2200, %v2201
    %v2203 = vmul.f32 %v2184, 0.125
    %v2204 = vmul.f32 %v2190, 0.125
    %v2205 = vmul.f32 %v2196, 0.125
    %v2206 = vmul.f32 %v2202, 0.125
    %v2207 = vmul.f32 %v2171, %v2171
    %v2208 = vmul.f32 %v2172, %v2172
    %v2209 = vmul.f32 %v2173, %v2173
    %v2210 = vmul.f32 %v2174, %v2174
    %v2211 = vsub.f32 %v2203, %v2207
    %v2212 = vsub.f32 %v2204, %v2208
    %v2213 = vsub.f32 %v2205, %v2209
    %v2214 = vsub.f32 %v2206, %v2210
    %v2215 = vld [vmem:[#allocation7] sm:$0xf]
    %v2216 = vadd.f32 %v2211, 1e-05
    %v2217 = vadd.f32 %v2212, 1e-05
    %v2218 = vadd.f32 %v2213, 1e-05
    %v2219 = vadd.f32 %v2214, 1e-05
    %v2220 = vrsqrt.pop %v2216
    %v2221 = vrsqrt.pop %v2217
    %v2222 = vrsqrt.pop %v2218
    %v2223 = vrsqrt.pop %v2219
    %v2228 = vcombine.low %v2220, %v2221
    %v2229 = vcombine.low %v2222, %v2223
    %v2231 = vunpack.c.l.s4 1966171168
    %v2232 = vunpack.c.0.s8 %v2231
    %v2233 = vlaneseq
    %v2234 = vshrl.u32 %v2233, 7
    %v2235 = vsub.s32 %v2232, %v2234
    %v2236 = vrot.slane %v2228, %v2235
    %v2238 = vunpack.c.l.s4 1966171168
    %v2239 = vunpack.c.0.s8 %v2238
    %v2240 = vlaneseq
    %v2241 = vshrl.u32 %v2240, 7
    %v2242 = vsub.s32 %v2239, %v2241
    %v2243 = vrot.slane %v2229, %v2242
    %v2244 = vcombine.low %v2236, %v2243
    %v2246 = vunpack.c.l.s4 1966171168
    %v2247 = vunpack.c.0.s8 %v2246
    %v2248 = vlaneseq
    %v2249 = vshrl.u32 %v2248, 7
    %v2250 = vsub.s32 %v2247, %v2249
    %v2251 = vrot.slane %v2244, %v2250
    %v2253 = vmul.f32 %v2215, %v2251
    %v2254 = vld [vmem:[#allocation8] sm:$0xf]
    %v2256 = vlaneseq
    %v2257 = vshrl.u32 %v2256, 7
    %v2258 = vsub.s32 0, %v2257
    %v2259 = vrot.slane %v2253, %v2258
    %v2260 = vlaneseq
    %v2261 = vshrl.u32 %v2260, 7
    %v2262 = vsub.s32 1, %v2261
    %v2263 = vrot.slane %v2253, %v2262
    %v2264 = vlaneseq
    %v2265 = vshrl.u32 %v2264, 7
    %v2266 = vsub.s32 2, %v2265
    %v2267 = vrot.slane %v2253, %v2266
    %v2268 = vlaneseq
    %v2269 = vshrl.u32 %v2268, 7
    %v2270 = vsub.s32 3, %v2269
    %v2271 = vrot.slane %v2253, %v2270
    %v2276 = vmul.f32 %v2171, %v2259
    %v2277 = vmul.f32 %v2172, %v2263
    %v2278 = vmul.f32 %v2173, %v2267
    %v2279 = vmul.f32 %v2174, %v2271
    %v2284 = vcombine.low %v2276, %v2277
    %v2285 = vcombine.low %v2278, %v2279
    %v2287 = vunpack.c.l.s4 1966171168
    %v2288 = vunpack.c.0.s8 %v2287
    %v2289 = vlaneseq
    %v2290 = vshrl.u32 %v2289, 7
    %v2291 = vsub.s32 %v2288, %v2290
    %v2292 = vrot.slane %v2284, %v2291
    %v2294 = vunpack.c.l.s4 1966171168
    %v2295 = vunpack.c.0.s8 %v2294
    %v2296 = vlaneseq
    %v2297 = vshrl.u32 %v2296, 7
    %v2298 = vsub.s32 %v2295, %v2297
    %v2299 = vrot.slane %v2285, %v2298
    %v2300 = vcombine.low %v2292, %v2299
    %v2302 = vunpack.c.l.s4 1966171168
    %v2303 = vunpack.c.0.s8 %v2302
    %v2304 = vlaneseq
    %v2305 = vshrl.u32 %v2304, 7
    %v2306 = vsub.s32 %v2303, %v2305
    %v2307 = vrot.slane %v2300, %v2306
    %v2309 = vsub.f32 %v2254, %v2307
    %v2310 = vmul.f32 %v1936, %v2259
    %v2311 = vmul.f32 %v1938, %v2263
    %v2312 = vmul.f32 %v2141, %v2267
    %v2313 = vmul.f32 %v2143, %v2271
    %v2315 = vlaneseq
    %v2316 = vshrl.u32 %v2315, 7
    %v2317 = vsub.s32 0, %v2316
    %v2318 = vrot.slane %v2309, %v2317
    %v2319 = vlaneseq
    %v2320 = vshrl.u32 %v2319, 7
    %v2321 = vsub.s32 1, %v2320
    %v2322 = vrot.slane %v2309, %v2321
    %v2323 = vlaneseq
    %v2324 = vshrl.u32 %v2323, 7
    %v2325 = vsub.s32 2, %v2324
    %v2326 = vrot.slane %v2309, %v2325
    %v2327 = vlaneseq
    %v2328 = vshrl.u32 %v2327, 7
    %v2329 = vsub.s32 3, %v2328
    %v2330 = vrot.slane %v2309, %v2329
    %v2335 = vadd.f32 %v2310, %v2318
    %v2336 = vadd.f32 %v2311, %v2322
    %v2337 = vadd.f32 %v2312, %v2326
    %v2338 = vadd.f32 %v2313, %v2330
    %v2339 = vmax.f32 %v2335, 0.0
    %v2340 = vmax.f32 %v2336, 0.0
    %v2341 = vmax.f32 %v2337, 0.0
    %v2342 = vmax.f32 %v2338, 0.0
    %v2343 = vpack.c.bf16 %v2339, %v2339
    %v2344 = vpack.c.bf16 %v2340, %v2340
    %v2345 = vpack.c.bf16 %v2341, %v2341
    %v2346 = vpack.c.bf16 %v2342, %v2342
    %v2347 = vld [vmem:[#allocation10] sm:$0xff]
    %v2348 = vld [vmem:[#allocation10 + $0x8] sm:$0xff]
    %v2349 = vld [vmem:[#allocation10 + $0x10] sm:$0xff]
    %v2350 = vld [vmem:[#allocation10 + $0x18] sm:$0xff]
    %v2351 = vld [vmem:[#allocation10 + $0x20] sm:$0xff]
    %v2352 = vld [vmem:[#allocation10 + $0x28] sm:$0xff]
    %v2353 = vld [vmem:[#allocation10 + $0x30] sm:$0xff]
    %v2354 = vld [vmem:[#allocation10 + $0x38] sm:$0xff]
    %v2355 = vld [vmem:[#allocation10 + $0x40] sm:$0xff]
    %v2356 = vld [vmem:[#allocation10 + $0x48] sm:$0xff]
    %v2357 = vld [vmem:[#allocation10 + $0x50] sm:$0xff]
    %v2358 = vld [vmem:[#allocation10 + $0x58] sm:$0xff]
    %v2359 = vld [vmem:[#allocation10 + $0x60] sm:$0xff]
    %v2360 = vld [vmem:[#allocation10 + $0x68] sm:$0xff]
    %v2361 = vld [vmem:[#allocation10 + $0x70] sm:$0xff]
    %v2362 = vld [vmem:[#allocation10 + $0x78] sm:$0xff]
    %v2363 = vld [vmem:[#allocation10 + $0x80] sm:$0xff]
    %v2364 = vld [vmem:[#allocation10 + $0x88] sm:$0xff]
    %v2365 = vld [vmem:[#allocation10 + $0x90] sm:$0xff]
    %v2366 = vld [vmem:[#allocation10 + $0x98] sm:$0xff]
    %v2367 = vld [vmem:[#allocation10 + $0xa0] sm:$0xff]
    %v2368 = vld [vmem:[#allocation10 + $0xa8] sm:$0xff]
    %v2369 = vld [vmem:[#allocation10 + $0xb0] sm:$0xff]
    %v2370 = vld [vmem:[#allocation10 + $0xb8] sm:$0xff]
    %v2371 = vld [vmem:[#allocation10 + $0xc0] sm:$0xff]
    %v2372 = vld [vmem:[#allocation10 + $0xc8] sm:$0xff]
    %v2373 = vld [vmem:[#allocation10 + $0xd0] sm:$0xff]
    %v2374 = vld [vmem:[#allocation10 + $0xd8] sm:$0xff]
    %v2375 = vld [vmem:[#allocation10 + $0xe0] sm:$0xff]
    %v2376 = vld [vmem:[#allocation10 + $0xe8] sm:$0xff]
    %v2377 = vld [vmem:[#allocation10 + $0xf0] sm:$0xff]
    %v2378 = vld [vmem:[#allocation10 + $0xf8] sm:$0xff]
    %v2379 = vld [vmem:[#allocation10 + $0x100] sm:$0xff]
    %v2380 = vld [vmem:[#allocation10 + $0x108] sm:$0xff]
    %v2381 = vld [vmem:[#allocation10 + $0x110] sm:$0xff]
    %v2382 = vld [vmem:[#allocation10 + $0x118] sm:$0xff]
    %v2383 = vld [vmem:[#allocation10 + $0x120] sm:$0xff]
    %v2384 = vld [vmem:[#allocation10 + $0x128] sm:$0xff]
    %v2385 = vld [vmem:[#allocation10 + $0x130] sm:$0xff]
    %v2386 = vld [vmem:[#allocation10 + $0x138] sm:$0xff]
    %v2387 = vld [vmem:[#allocation10 + $0x140] sm:$0xff]
    %v2388 = vld [vmem:[#allocation10 + $0x148] sm:$0xff]
    %v2389 = vld [vmem:[#allocation10 + $0x150] sm:$0xff]
    %v2390 = vld [vmem:[#allocation10 + $0x158] sm:$0xff]
    %v2391 = vld [vmem:[#allocation10 + $0x160] sm:$0xff]
    %v2392 = vld [vmem:[#allocation10 + $0x168] sm:$0xff]
    %v2393 = vld [vmem:[#allocation10 + $0x170] sm:$0xff]
    %v2394 = vld [vmem:[#allocation10 + $0x178] sm:$0xff]
    %v2395 = vld [vmem:[#allocation10 + $0x180] sm:$0xff]
    %v2396 = vld [vmem:[#allocation10 + $0x188] sm:$0xff]
    %v2397 = vld [vmem:[#allocation10 + $0x190] sm:$0xff]
    %v2398 = vld [vmem:[#allocation10 + $0x198] sm:$0xff]
    %v2399 = vld [vmem:[#allocation10 + $0x1a0] sm:$0xff]
    %v2400 = vld [vmem:[#allocation10 + $0x1a8] sm:$0xff]
    %v2401 = vld [vmem:[#allocation10 + $0x1b0] sm:$0xff]
    %v2402 = vld [vmem:[#allocation10 + $0x1b8] sm:$0xff]
    %v2403 = vld [vmem:[#allocation10 + $0x1c0] sm:$0xff]
    %v2404 = vld [vmem:[#allocation10 + $0x1c8] sm:$0xff]
    %v2405 = vld [vmem:[#allocation10 + $0x1d0] sm:$0xff]
    %v2406 = vld [vmem:[#allocation10 + $0x1d8] sm:$0xff]
    %v2407 = vld [vmem:[#allocation10 + $0x1e0] sm:$0xff]
    %v2408 = vld [vmem:[#allocation10 + $0x1e8] sm:$0xff]
    %v2409 = vld [vmem:[#allocation10 + $0x1f0] sm:$0xff]
    %v2410 = vld [vmem:[#allocation10 + $0x1f8] sm:$0xff]
    %v2475 = vunpack.c.l.b16 %v2347
    %v2476 = vunpack.c.h.b16 %v2347
    %v2477 = vunpack.c.l.b16 %v2348
    %v2478 = vunpack.c.h.b16 %v2348
    %v2479 = vunpack.c.l.b16 %v2349
    %v2480 = vunpack.c.h.b16 %v2349
    %v2481 = vunpack.c.l.b16 %v2350
    %v2482 = vunpack.c.h.b16 %v2350
    %v2483 = vunpack.c.l.b16 %v2351
    %v2484 = vunpack.c.h.b16 %v2351
    %v2485 = vunpack.c.l.b16 %v2352
    %v2486 = vunpack.c.h.b16 %v2352
    %v2487 = vunpack.c.l.b16 %v2353
    %v2488 = vunpack.c.h.b16 %v2353
    %v2489 = vunpack.c.l.b16 %v2354
    %v2490 = vunpack.c.h.b16 %v2354
    %v2491 = vunpack.c.l.b16 %v2355
    %v2492 = vunpack.c.h.b16 %v2355
    %v2493 = vunpack.c.l.b16 %v2356
    %v2494 = vunpack.c.h.b16 %v2356
    %v2495 = vunpack.c.l.b16 %v2357
    %v2496 = vunpack.c.h.b16 %v2357
    %v2497 = vunpack.c.l.b16 %v2358
    %v2498 = vunpack.c.h.b16 %v2358
    %v2499 = vunpack.c.l.b16 %v2359
    %v2500 = vunpack.c.h.b16 %v2359
    %v2501 = vunpack.c.l.b16 %v2360
    %v2502 = vunpack.c.h.b16 %v2360
    %v2503 = vunpack.c.l.b16 %v2361
    %v2504 = vunpack.c.h.b16 %v2361
    %v2505 = vunpack.c.l.b16 %v2362
    %v2506 = vunpack.c.h.b16 %v2362
    %v2507 = vunpack.c.l.b16 %v2363
    %v2508 = vunpack.c.h.b16 %v2363
    %v2509 = vunpack.c.l.b16 %v2364
    %v2510 = vunpack.c.h.b16 %v2364
    %v2511 = vunpack.c.l.b16 %v2365
    %v2512 = vunpack.c.h.b16 %v2365
    %v2513 = vunpack.c.l.b16 %v2366
    %v2514 = vunpack.c.h.b16 %v2366
    %v2515 = vunpack.c.l.b16 %v2367
    %v2516 = vunpack.c.h.b16 %v2367
    %v2517 = vunpack.c.l.b16 %v2368
    %v2518 = vunpack.c.h.b16 %v2368
    %v2519 = vunpack.c.l.b16 %v2369
    %v2520 = vunpack.c.h.b16 %v2369
    %v2521 = vunpack.c.l.b16 %v2370
    %v2522 = vunpack.c.h.b16 %v2370
    %v2523 = vunpack.c.l.b16 %v2371
    %v2524 = vunpack.c.h.b16 %v2371
    %v2525 = vunpack.c.l.b16 %v2372
    %v2526 = vunpack.c.h.b16 %v2372
    %v2527 = vunpack.c.l.b16 %v2373
    %v2528 = vunpack.c.h.b16 %v2373
    %v2529 = vunpack.c.l.b16 %v2374
    %v2530 = vunpack.c.h.b16 %v2374
    %v2531 = vunpack.c.l.b16 %v2375
    %v2532 = vunpack.c.h.b16 %v2375
    %v2533 = vunpack.c.l.b16 %v2376
    %v2534 = vunpack.c.h.b16 %v2376
    %v2535 = vunpack.c.l.b16 %v2377
    %v2536 = vunpack.c.h.b16 %v2377
    %v2537 = vunpack.c.l.b16 %v2378
    %v2538 = vunpack.c.h.b16 %v2378
    %v2539 = vunpack.c.l.b16 %v2379
    %v2540 = vunpack.c.h.b16 %v2379
    %v2541 = vunpack.c.l.b16 %v2380
    %v2542 = vunpack.c.h.b16 %v2380
    %v2543 = vunpack.c.l.b16 %v2381
    %v2544 = vunpack.c.h.b16 %v2381
    %v2545 = vunpack.c.l.b16 %v2382
    %v2546 = vunpack.c.h.b16 %v2382
    %v2547 = vunpack.c.l.b16 %v2383
    %v2548 = vunpack.c.h.b16 %v2383
    %v2549 = vunpack.c.l.b16 %v2384
    %v2550 = vunpack.c.h.b16 %v2384
    %v2551 = vunpack.c.l.b16 %v2385
    %v2552 = vunpack.c.h.b16 %v2385
    %v2553 = vunpack.c.l.b16 %v2386
    %v2554 = vunpack.c.h.b16 %v2386
    %v2555 = vunpack.c.l.b16 %v2387
    %v2556 = vunpack.c.h.b16 %v2387
    %v2557 = vunpack.c.l.b16 %v2388
    %v2558 = vunpack.c.h.b16 %v2388
    %v2559 = vunpack.c.l.b16 %v2389
    %v2560 = vunpack.c.h.b16 %v2389
    %v2561 = vunpack.c.l.b16 %v2390
    %v2562 = vunpack.c.h.b16 %v2390
    %v2563 = vunpack.c.l.b16 %v2391
    %v2564 = vunpack.c.h.b16 %v2391
    %v2565 = vunpack.c.l.b16 %v2392
    %v2566 = vunpack.c.h.b16 %v2392
    %v2567 = vunpack.c.l.b16 %v2393
    %v2568 = vunpack.c.h.b16 %v2393
    %v2569 = vunpack.c.l.b16 %v2394
    %v2570 = vunpack.c.h.b16 %v2394
    %v2571 = vunpack.c.l.b16 %v2395
    %v2572 = vunpack.c.h.b16 %v2395
    %v2573 = vunpack.c.l.b16 %v2396
    %v2574 = vunpack.c.h.b16 %v2396
    %v2575 = vunpack.c.l.b16 %v2397
    %v2576 = vunpack.c.h.b16 %v2397
    %v2577 = vunpack.c.l.b16 %v2398
    %v2578 = vunpack.c.h.b16 %v2398
    %v2579 = vunpack.c.l.b16 %v2399
    %v2580 = vunpack.c.h.b16 %v2399
    %v2581 = vunpack.c.l.b16 %v2400
    %v2582 = vunpack.c.h.b16 %v2400
    %v2583 = vunpack.c.l.b16 %v2401
    %v2584 = vunpack.c.h.b16 %v2401
    %v2585 = vunpack.c.l.b16 %v2402
    %v2586 = vunpack.c.h.b16 %v2402
    %v2587 = vunpack.c.l.b16 %v2403
    %v2588 = vunpack.c.h.b16 %v2403
    %v2589 = vunpack.c.l.b16 %v2404
    %v2590 = vunpack.c.h.b16 %v2404
    %v2591 = vunpack.c.l.b16 %v2405
    %v2592 = vunpack.c.h.b16 %v2405
    %v2593 = vunpack.c.l.b16 %v2406
    %v2594 = vunpack.c.h.b16 %v2406
    %v2595 = vunpack.c.l.b16 %v2407
    %v2596 = vunpack.c.h.b16 %v2407
    %v2597 = vunpack.c.l.b16 %v2408
    %v2598 = vunpack.c.h.b16 %v2408
    %v2599 = vunpack.c.l.b16 %v2409
    %v2600 = vunpack.c.h.b16 %v2409
    %v2601 = vunpack.c.l.b16 %v2410
    %v2602 = vunpack.c.h.b16 %v2410
    %v2603 = vpack.c.b16 %v2477, %v2475
    %v2604 = vpack.c.b16 %v2478, %v2476
    %v2605 = vpack.c.b16 %v2481, %v2479
    %v2606 = vpack.c.b16 %v2482, %v2480
    %v2607 = vpack.c.b16 %v2485, %v2483
    %v2608 = vpack.c.b16 %v2486, %v2484
    %v2609 = vpack.c.b16 %v2489, %v2487
    %v2610 = vpack.c.b16 %v2490, %v2488
    %v2611 = vpack.c.b16 %v2493, %v2491
    %v2612 = vpack.c.b16 %v2494, %v2492
    %v2613 = vpack.c.b16 %v2497, %v2495
    %v2614 = vpack.c.b16 %v2498, %v2496
    %v2615 = vpack.c.b16 %v2501, %v2499
    %v2616 = vpack.c.b16 %v2502, %v2500
    %v2617 = vpack.c.b16 %v2505, %v2503
    %v2618 = vpack.c.b16 %v2506, %v2504
    %v2619 = vpack.c.b16 %v2509, %v2507
    %v2620 = vpack.c.b16 %v2510, %v2508
    %v2621 = vpack.c.b16 %v2513, %v2511
    %v2622 = vpack.c.b16 %v2514, %v2512
    %v2623 = vpack.c.b16 %v2517, %v2515
    %v2624 = vpack.c.b16 %v2518, %v2516
    %v2625 = vpack.c.b16 %v2521, %v2519
    %v2626 = vpack.c.b16 %v2522, %v2520
    %v2627 = vpack.c.b16 %v2525, %v2523
    %v2628 = vpack.c.b16 %v2526, %v2524
    %v2629 = vpack.c.b16 %v2529, %v2527
    %v2630 = vpack.c.b16 %v2530, %v2528
    %v2631 = vpack.c.b16 %v2533, %v2531
    %v2632 = vpack.c.b16 %v2534, %v2532
    %v2633 = vpack.c.b16 %v2537, %v2535
    %v2634 = vpack.c.b16 %v2538, %v2536
    %v2635 = vpack.c.b16 %v2541, %v2539
    %v2636 = vpack.c.b16 %v2542, %v2540
    %v2637 = vpack.c.b16 %v2545, %v2543
    %v2638 = vpack.c.b16 %v2546, %v2544
    %v2639 = vpack.c.b16 %v2549, %v2547
    %v2640 = vpack.c.b16 %v2550, %v2548
    %v2641 = vpack.c.b16 %v2553, %v2551
    %v2642 = vpack.c.b16 %v2554, %v2552
    %v2643 = vpack.c.b16 %v2557, %v2555
    %v2644 = vpack.c.b16 %v2558, %v2556
    %v2645 = vpack.c.b16 %v2561, %v2559
    %v2646 = vpack.c.b16 %v2562, %v2560
    %v2647 = vpack.c.b16 %v2565, %v2563
    %v2648 = vpack.c.b16 %v2566, %v2564
    %v2649 = vpack.c.b16 %v2569, %v2567
    %v2650 = vpack.c.b16 %v2570, %v2568
    %v2651 = vpack.c.b16 %v2573, %v2571
    %v2652 = vpack.c.b16 %v2574, %v2572
    %v2653 = vpack.c.b16 %v2577, %v2575
    %v2654 = vpack.c.b16 %v2578, %v2576
    %v2655 = vpack.c.b16 %v2581, %v2579
    %v2656 = vpack.c.b16 %v2582, %v2580
    %v2657 = vpack.c.b16 %v2585, %v2583
    %v2658 = vpack.c.b16 %v2586, %v2584
    %v2659 = vpack.c.b16 %v2589, %v2587
    %v2660 = vpack.c.b16 %v2590, %v2588
    %v2661 = vpack.c.b16 %v2593, %v2591
    %v2662 = vpack.c.b16 %v2594, %v2592
    %v2663 = vpack.c.b16 %v2597, %v2595
    %v2664 = vpack.c.b16 %v2598, %v2596
    %v2665 = vpack.c.b16 %v2601, %v2599
    %v2666 = vpack.c.b16 %v2602, %v2600
    %2731 = vmatprep.subr.bf16.mxu0 %v2604
    %2732 = vmatpush1.bf16.msra.mxu0 %v2603
    %2733 = vmatprep.subr.bf16.mxu0 %v2606
    %2734 = vmatpush1.bf16.msra.mxu0 %v2605
    %2735 = vmatprep.subr.bf16.mxu0 %v2608
    %2736 = vmatpush1.bf16.msra.mxu0 %v2607
    %2737 = vmatprep.subr.bf16.mxu0 %v2610
    %2738 = vmatpush1.bf16.msra.mxu0 %v2609
    %2739 = vmatprep.subr.bf16.mxu0 %v2612
    %2740 = vmatpush1.bf16.msra.mxu0 %v2611
    %2741 = vmatprep.subr.bf16.mxu0 %v2614
    %2742 = vmatpush1.bf16.msra.mxu0 %v2613
    %2743 = vmatprep.subr.bf16.mxu0 %v2616
    %2744 = vmatpush1.bf16.msra.mxu0 %v2615
    %2745 = vmatprep.subr.bf16.mxu0 %v2618
    %2746 = vmatpush1.bf16.msra.mxu0 %v2617
    %2747 = vmatprep.subr.bf16.mxu0 %v2620
    %2748 = vmatpush1.bf16.msra.mxu0 %v2619
    %2749 = vmatprep.subr.bf16.mxu0 %v2622
    %2750 = vmatpush1.bf16.msra.mxu0 %v2621
    %2751 = vmatprep.subr.bf16.mxu0 %v2624
    %2752 = vmatpush1.bf16.msra.mxu0 %v2623
    %2753 = vmatprep.subr.bf16.mxu0 %v2626
    %2754 = vmatpush1.bf16.msra.mxu0 %v2625
    %2755 = vmatprep.subr.bf16.mxu0 %v2628
    %2756 = vmatpush1.bf16.msra.mxu0 %v2627
    %2757 = vmatprep.subr.bf16.mxu0 %v2630
    %2758 = vmatpush1.bf16.msra.mxu0 %v2629
    %2759 = vmatprep.subr.bf16.mxu0 %v2632
    %2760 = vmatpush1.bf16.msra.mxu0 %v2631
    %2761 = vmatprep.subr.bf16.mxu0 %v2634
    %2762 = vmatpush1.bf16.msra.mxu0 %v2633
    %2763 = vmatprep.mubr.bf16.mxu0 %v2344
    %2764 = vmatmul.mubr.bf16.gmra.mrb[0].mxu0 %v2343
    %v2765 = vpop.f32.mrb[0].mxu0
    %v2766 = vadd.f32 0.0, %v2765
    %v2767 = vpop.f32.mrb[0].mxu0
    %v2768 = vadd.f32 0.0, %v2767
    %v2769 = vpop.f32.mrb[0].mxu0
    %v2770 = vpop.f32.mrb[0].mxu0
    %2771 = vdwg.mxu0
    %2772 = vmatprep.subr.bf16.mxu0 %v2636
    %2773 = vmatpush1.bf16.msra.mxu0 %v2635
    %2774 = vmatprep.subr.bf16.mxu0 %v2638
    %2775 = vmatpush1.bf16.msra.mxu0 %v2637
    %2776 = vmatprep.subr.bf16.mxu0 %v2640
    %2777 = vmatpush1.bf16.msra.mxu0 %v2639
    %2778 = vmatprep.subr.bf16.mxu0 %v2642
    %2779 = vmatpush1.bf16.msra.mxu0 %v2641
    %2780 = vmatprep.subr.bf16.mxu0 %v2644
    %2781 = vmatpush1.bf16.msra.mxu0 %v2643
    %2782 = vmatprep.subr.bf16.mxu0 %v2646
    %2783 = vmatpush1.bf16.msra.mxu0 %v2645
    %2784 = vmatprep.subr.bf16.mxu0 %v2648
    %2785 = vmatpush1.bf16.msra.mxu0 %v2647
    %2786 = vmatprep.subr.bf16.mxu0 %v2650
    %2787 = vmatpush1.bf16.msra.mxu0 %v2649
    %2788 = vmatprep.subr.bf16.mxu0 %v2652
    %2789 = vmatpush1.bf16.msra.mxu0 %v2651
    %2790 = vmatprep.subr.bf16.mxu0 %v2654
    %2791 = vmatpush1.bf16.msra.mxu0 %v2653
    %2792 = vmatprep.subr.bf16.mxu0 %v2656
    %2793 = vmatpush1.bf16.msra.mxu0 %v2655
    %2794 = vmatprep.subr.bf16.mxu0 %v2658
    %2795 = vmatpush1.bf16.msra.mxu0 %v2657
    %2796 = vmatprep.subr.bf16.mxu0 %v2660
    %2797 = vmatpush1.bf16.msra.mxu0 %v2659
    %2798 = vmatprep.subr.bf16.mxu0 %v2662
    %2799 = vmatpush1.bf16.msra.mxu0 %v2661
    %2800 = vmatprep.subr.bf16.mxu0 %v2664
    %2801 = vmatpush1.bf16.msra.mxu0 %v2663
    %2802 = vmatprep.subr.bf16.mxu0 %v2666
    %2803 = vmatpush1.bf16.msra.mxu0 %v2665
    %2804 = vmatprep.mubr.bf16.mxu0 %v2346
    %2805 = vmatmul.mubr.bf16.gmra.mrb[0].mxu0 %v2345
    %v2806 = vpop.f32.mrb[0].mxu0
    %v2807 = vadd.f32 %v2766, %v2806
    %v2808 = vpop.f32.mrb[0].mxu0
    %v2809 = vadd.f32 %v2768, %v2808
    %v2810 = vpop.f32.mrb[0].mxu0
    %v2811 = vpop.f32.mrb[0].mxu0
    %2812 = vdwg.mxu0
    %v2813 = vrot.slane %v2807, 4
    %v2814 = vadd.f32 %v2807, %v2813
    %v2815 = vrot.slane %v2814, 2
    %v2816 = vadd.f32 %v2814, %v2815
    %v2817 = vrot.slane %v2816, 1
    %v2818 = vadd.f32 %v2816, %v2817
    %v2819 = vrot.slane %v2809, 4
    %v2820 = vadd.f32 %v2809, %v2819
    %v2821 = vrot.slane %v2820, 2
    %v2822 = vadd.f32 %v2820, %v2821
    %v2823 = vrot.slane %v2822, 1
    %v2824 = vadd.f32 %v2822, %v2823
    %v2825 = vmul.f32 %v2818, 0.125
    %v2826 = vmul.f32 %v2824, 0.125
    %v2827 = vmul.f32 %v2807, %v2807
    %v2828 = vmul.f32 %v2809, %v2809
    %v2829 = vrot.slane %v2827, 4
    %v2830 = vadd.f32 %v2827, %v2829
    %v2831 = vrot.slane %v2830, 2
    %v2832 = vadd.f32 %v2830, %v2831
    %v2833 = vrot.slane %v2832, 1
    %v2834 = vadd.f32 %v2832, %v2833
    %v2835 = vrot.slane %v2828, 4
    %v2836 = vadd.f32 %v2828, %v2835
    %v2837 = vrot.slane %v2836, 2
    %v2838 = vadd.f32 %v2836, %v2837
    %v2839 = vrot.slane %v2838, 1
    %v2840 = vadd.f32 %v2838, %v2839
    %v2841 = vmul.f32 %v2834, 0.125
    %v2842 = vmul.f32 %v2840, 0.125
    %v2843 = vmul.f32 %v2825, %v2825
    %v2844 = vmul.f32 %v2826, %v2826
    %v2845 = vsub.f32 %v2841, %v2843
    %v2846 = vsub.f32 %v2842, %v2844
    %v2847 = vld [vmem:[#allocation11] sm:$0x3]
    %v2848 = vadd.f32 %v2845, 1e-05
    %v2849 = vadd.f32 %v2846, 1e-05
    %v2850 = vrsqrt.pop %v2848
    %v2851 = vrsqrt.pop %v2849
    %v2854 = vcombine.low %v2850, %v2851
    %v2856 = vunpack.c.l.s4 1966171168
    %v2857 = vunpack.c.0.s8 %v2856
    %v2858 = vlaneseq
    %v2859 = vshrl.u32 %v2858, 7
    %v2860 = vsub.s32 %v2857, %v2859
    %v2861 = vrot.slane %v2854, %v2860
    %v2863 = vunpack.c.l.s4 1966171168
    %v2864 = vunpack.c.0.s8 %v2863
    %v2865 = vlaneseq
    %v2866 = vshrl.u32 %v2865, 7
    %v2867 = vsub.s32 %v2864, %v2866
    %v2868 = vrot.slane %v2861, %v2867
    %v2870 = vmul.f32 %v2847, %v2868
    %v2871 = vld [vmem:[#allocation13] sm:$0x3]
    %v2873 = vlaneseq
    %v2874 = vshrl.u32 %v2873, 7
    %v2875 = vsub.s32 0, %v2874
    %v2876 = vrot.slane %v2870, %v2875
    %v2877 = vlaneseq
    %v2878 = vshrl.u32 %v2877, 7
    %v2879 = vsub.s32 1, %v2878
    %v2880 = vrot.slane %v2870, %v2879
    %v2883 = vmul.f32 %v2825, %v2876
    %v2884 = vmul.f32 %v2826, %v2880
    %v2887 = vcombine.low %v2883, %v2884
    %v2889 = vunpack.c.l.s4 1966171168
    %v2890 = vunpack.c.0.s8 %v2889
    %v2891 = vlaneseq
    %v2892 = vshrl.u32 %v2891, 7
    %v2893 = vsub.s32 %v2890, %v2892
    %v2894 = vrot.slane %v2887, %v2893
    %v2896 = vunpack.c.l.s4 1966171168
    %v2897 = vunpack.c.0.s8 %v2896
    %v2898 = vlaneseq
    %v2899 = vshrl.u32 %v2898, 7
    %v2900 = vsub.s32 %v2897, %v2899
    %v2901 = vrot.slane %v2894, %v2900
    %v2903 = vsub.f32 %v2871, %v2901
    %v2904 = vmul.f32 %v2807, %v2876
    %v2905 = vmul.f32 %v2809, %v2880
    %v2907 = vlaneseq
    %v2908 = vshrl.u32 %v2907, 7
    %v2909 = vsub.s32 0, %v2908
    %v2910 = vrot.slane %v2903, %v2909
    %v2911 = vlaneseq
    %v2912 = vshrl.u32 %v2911, 7
    %v2913 = vsub.s32 1, %v2912
    %v2914 = vrot.slane %v2903, %v2913
    %v2917 = vadd.f32 %v2904, %v2910
    %v2918 = vadd.f32 %v2905, %v2914
    %v2919 = vmax.f32 %v2917, 0.0
    %v2920 = vmax.f32 %v2918, 0.0
    %v2921 = vld [vmem:[%s7] sm:$0xff]
    %v2922 = vld [vmem:[%s7 + $0x8] sm:$0xff]
    %v2923 = vld [vmem:[%s7 + $0x10] sm:$0xff]
    %v2924 = vld [vmem:[%s7 + $0x18] sm:$0xff]
    %v2925 = vld [vmem:[%s7 + $0x20] sm:$0xff]
    %v2926 = vld [vmem:[%s7 + $0x28] sm:$0xff]
    %v2927 = vld [vmem:[%s7 + $0x30] sm:$0xff]
    %v2928 = vld [vmem:[%s7 + $0x38] sm:$0xff]
    %v2929 = vld [vmem:[%s7 + $0x40] sm:$0xff]
    %v2930 = vld [vmem:[%s7 + $0x48] sm:$0xff]
    %v2931 = vld [vmem:[%s7 + $0x50] sm:$0xff]
    %v2932 = vld [vmem:[%s7 + $0x58] sm:$0xff]
    %v2933 = vld [vmem:[%s7 + $0x60] sm:$0xff]
    %v2934 = vld [vmem:[%s7 + $0x68] sm:$0xff]
    %v2935 = vld [vmem:[%s7 + $0x70] sm:$0xff]
    %v2936 = vld [vmem:[%s7 + $0x78] sm:$0xff]
    %v2937 = vld [vmem:[%s7 + $0x80] sm:$0xff]
    %v2938 = vld [vmem:[%s7 + $0x88] sm:$0xff]
    %v2939 = vld [vmem:[%s7 + $0x90] sm:$0xff]
    %v2940 = vld [vmem:[%s7 + $0x98] sm:$0xff]
    %v2941 = vld [vmem:[%s7 + $0xa0] sm:$0xff]
    %v2942 = vld [vmem:[%s7 + $0xa8] sm:$0xff]
    %v2943 = vld [vmem:[%s7 + $0xb0] sm:$0xff]
    %v2944 = vld [vmem:[%s7 + $0xb8] sm:$0xff]
    %v2945 = vld [vmem:[%s7 + $0xc0] sm:$0xff]
    %v2946 = vld [vmem:[%s7 + $0xc8] sm:$0xff]
    %v2947 = vld [vmem:[%s7 + $0xd0] sm:$0xff]
    %v2948 = vld [vmem:[%s7 + $0xd8] sm:$0xff]
    %v2949 = vld [vmem:[%s7 + $0xe0] sm:$0xff]
    %v2950 = vld [vmem:[%s7 + $0xe8] sm:$0xff]
    %v2951 = vld [vmem:[%s7 + $0xf0] sm:$0xff]
    %v2952 = vld [vmem:[%s7 + $0xf8] sm:$0xff]
    %v2953 = vld [vmem:[#allocation14] sm:$0x1]
    %v2955 = vlaneseq
    %v2956 = vshrl.u32 %v2955, 7
    %v2957 = vsub.s32 0, %v2956
    %v2958 = vrot.slane %v2953, %v2957
    %2960 = vmatprep.subr.mxu0 0.0
    %2961 = vmatpush1.msra.mxu0 %v2921
    %2962 = vmatprep.subr.mxu0 0.0
    %2963 = vmatpush1.msra.mxu0 %v2922
    %2964 = vmatprep.subr.mxu0 0.0
    %2965 = vmatpush1.msra.mxu0 %v2923
    %2966 = vmatprep.subr.mxu0 0.0
    %2967 = vmatpush1.msra.mxu0 %v2924
    %2968 = vmatprep.subr.mxu0 0.0
    %2969 = vmatpush1.msra.mxu0 %v2925
    %2970 = vmatprep.subr.mxu0 0.0
    %2971 = vmatpush1.msra.mxu0 %v2926
    %2972 = vmatprep.subr.mxu0 0.0
    %2973 = vmatpush1.msra.mxu0 %v2927
    %2974 = vmatprep.subr.mxu0 0.0
    %2975 = vmatpush1.msra.mxu0 %v2928
    %2976 = vmatprep.subr.mxu0 0.0
    %2977 = vmatpush1.msra.mxu0 %v2929
    %2978 = vmatprep.subr.mxu0 0.0
    %2979 = vmatpush1.msra.mxu0 %v2930
    %2980 = vmatprep.subr.mxu0 0.0
    %2981 = vmatpush1.msra.mxu0 %v2931
    %2982 = vmatprep.subr.mxu0 0.0
    %2983 = vmatpush1.msra.mxu0 %v2932
    %2984 = vmatprep.subr.mxu0 0.0
    %2985 = vmatpush1.msra.mxu0 %v2933
    %2986 = vmatprep.subr.mxu0 0.0
    %2987 = vmatpush1.msra.mxu0 %v2934
    %2988 = vmatprep.subr.mxu0 0.0
    %2989 = vmatpush1.msra.mxu0 %v2935
    %2990 = vmatprep.subr.mxu0 0.0
    %2991 = vmatpush1.msra.mxu0 %v2936
    %2992 = vmatprep.subr.mxu0 0.0
    %2993 = vmatpush1.msra.mxu0 %v2937
    %2994 = vmatprep.subr.mxu0 0.0
    %2995 = vmatpush1.msra.mxu0 %v2938
    %2996 = vmatprep.subr.mxu0 0.0
    %2997 = vmatpush1.msra.mxu0 %v2939
    %2998 = vmatprep.subr.mxu0 0.0
    %2999 = vmatpush1.msra.mxu0 %v2940
    %3000 = vmatprep.subr.mxu0 0.0
    %3001 = vmatpush1.msra.mxu0 %v2941
    %3002 = vmatprep.subr.mxu0 0.0
    %3003 = vmatpush1.msra.mxu0 %v2942
    %3004 = vmatprep.subr.mxu0 0.0
    %3005 = vmatpush1.msra.mxu0 %v2943
    %3006 = vmatprep.subr.mxu0 0.0
    %3007 = vmatpush1.msra.mxu0 %v2944
    %3008 = vmatprep.subr.mxu0 0.0
    %3009 = vmatpush1.msra.mxu0 %v2945
    %3010 = vmatprep.subr.mxu0 0.0
    %3011 = vmatpush1.msra.mxu0 %v2946
    %3012 = vmatprep.subr.mxu0 0.0
    %3013 = vmatpush1.msra.mxu0 %v2947
    %3014 = vmatprep.subr.mxu0 0.0
    %3015 = vmatpush1.msra.mxu0 %v2948
    %3016 = vmatprep.subr.mxu0 0.0
    %3017 = vmatpush1.msra.mxu0 %v2949
    %3018 = vmatprep.subr.mxu0 0.0
    %3019 = vmatpush1.msra.mxu0 %v2950
    %3020 = vmatprep.subr.mxu0 0.0
    %3021 = vmatpush1.msra.mxu0 %v2951
    %3022 = vmatprep.subr.mxu0 0.0
    %3023 = vmatpush1.msra.mxu0 %v2952
    %3024 = vmatprep.mubr.f32.mxu0 %v2920
    %3025 = vmatmul.mubr.f32.gmra.mrb[0].mxu0 %v2919
    %v3026 = vpop.f32.mrb[0].mxu0
    %v3027 = vadd.f32 %v2958, %v3026
    %v3028 = vpop.f32.mrb[0].mxu0
    %3029 = vdwg.mxu0
    %v3030 = vadd.f32 %v3027, 1.0
    %v3031 = vmul.f32 %v3030, %v3030
    %v3032 = vmul.f32 %v3027, %v3027
    %3034 = vrot.lane.b32.xlu0 %v3032, 127
    %v3035 = vpop.permute.xlu0 %3034
    %v3037 = vadd.f32 %v3031, %v3035
    %3038 = vrot.lane.b32.xlu0 %v3032, 126
    %v3039 = vpop.permute.xlu0 %3038
    %v3041 = vadd.f32 %v3037, %v3039
    %3042 = vrot.lane.b32.xlu0 %v3032, 125
    %v3043 = vpop.permute.xlu0 %3042
    %v3045 = vadd.f32 %v3041, %v3043
    %v3046 = vrcp.pop %v3045
    %v3047 = vmul.f32 %v3046, 2.0
    %v3048 = vadd.f32 %v3032, %v3035
    %3050 = vrot.lane.b32.xlu0 %v3047, 2
    %v3051 = vpop.permute.xlu0 %3050
    %v3053 = vmul.f32 %v3048, %v3051
    %v3054 = vsub.f32 1.0, %v3053
    %3056 = vrot.lane.b32.xlu0 %v3027, 127
    %v3057 = vpop.permute.xlu0 %3056
    %v3059 = vmul.f32 %v3027, %v3057
    %3061 = vrot.lane.b32.xlu0 %v3030, 3
    %v3062 = vpop.permute.xlu0 %3061
    %v3064 = vmul.f32 %v3027, %v3062
    %3066 = vrot.lane.b32.xlu0 %v3064, 126
    %v3067 = vpop.permute.xlu0 %3066
    %v3069 = vsub.f32 %v3059, %v3067
    %3070 = vrot.lane.b32.xlu0 %v3047, 1
    %v3071 = vpop.permute.xlu0 %3070
    %v3073 = vmul.f32 %v3069, %v3071
    %3074 = vrot.lane.b32.xlu0 %v3027, 126
    %v3075 = vpop.permute.xlu0 %3074
    %v3077 = vmul.f32 %v3027, %v3075
    %3078 = vrot.lane.b32.xlu0 %v3030, 2
    %v3079 = vpop.permute.xlu0 %3078
    %v3081 = vmul.f32 %v3027, %v3079
    %3083 = vrot.lane.b32.xlu0 %v3081, 127
    %v3084 = vpop.permute.xlu0 %3083
    %v3086 = vadd.f32 %v3077, %v3084
    %v3087 = vmul.f32 %v3086, %v3071
    %v3088 = vadd.f32 %v3059, %v3067
    %v3089 = vmul.f32 %v3088, %v3071
    %v3090 = vadd.f32 %v3032, %v3039
    %v3091 = vmul.f32 %v3090, %v3071
    %v3092 = vsub.f32 1.0, %v3091
    %3093 = vrot.lane.b32.xlu0 %v3030, 1
    %v3094 = vpop.permute.xlu0 %3093
    %v3096 = vmul.f32 %v3027, %v3094
    %3098 = vrot.lane.b32.xlu0 %v3096, 1
    %v3099 = vpop.permute.xlu0 %3098
    %v3101 = vsub.f32 %v3059, %v3099
    %v3102 = vmul.f32 %v3101, %v3051
    %v3103 = vsub.f32 %v3077, %v3084
    %v3104 = vmul.f32 %v3103, %v3071
    %v3105 = vadd.f32 %v3059, %v3099
    %v3106 = vmul.f32 %v3105, %v3051
    %v3107 = vmul.f32 %v3048, %v3071
    %v3108 = vsub.f32 1.0, %v3107
    %3110 = vrot.lane.b32.xlu0 %v3054, 126
    %v3111 = vpop.permute.xlu0 %3110
    %3114 = vrot.lane.b32.xlu0 %v3087, 1
    %v3115 = vpop.permute.xlu0 %3114
    %3118 = vrot.lane.b32.xlu0 %v3089, 2
    %v3119 = vpop.permute.xlu0 %3118
    %3122 = vrot.lane.b32.xlu0 %v3092, 3
    %v3123 = vpop.permute.xlu0 %3122
    %3126 = vrot.lane.b32.xlu0 %v3102, 3
    %v3127 = vpop.permute.xlu0 %3126
    %3130 = vrot.lane.b32.xlu0 %v3104, 5
    %v3131 = vpop.permute.xlu0 %3130
    %3134 = vrot.lane.b32.xlu0 %v3106, 5
    %v3135 = vpop.permute.xlu0 %3134
    %3138 = vrot.lane.b32.xlu0 %v3108, 7
    %v3139 = vpop.permute.xlu0 %3138
    %vm3141 = vcmask 7168
    %v3142 = vsel %vm3141, %v3111, %v3073
    %vm3143 = vcmask 15360
    %v3144 = vsel %vm3143, %v3142, %v3115
    %vm3145 = vcmask 23552
    %v3146 = vsel %vm3145, %v3144, %v3119
    %vm3147 = vcmask 31744
    %v3148 = vsel %vm3147, %v3146, %v3123
    %vm3149 = vcmask 39936
    %v3150 = vsel %vm3149, %v3148, %v3127
    %vm3151 = vcmask 48128
    %v3152 = vsel %vm3151, %v3150, %v3131
    %vm3153 = vcmask 56320
    %v3154 = vsel %vm3153, %v3152, %v3135
    %vm3155 = vcmask 64512
    %v3156 = vsel %vm3155, %v3154, %v3139
    %vm3157 = vcmask 72704
    %3158 = vst.msk [vmem:[#allocation16] sm:$0xff] %vm3157, %v3156
    // Predicated region
    $region70: #{tpu_custom_call.1} parent=1 // pred_check
      _
    $region71: #{tpu_custom_call.1} parent=1 // pred_check_branch
      %3160 = sbr.rel (0) target = $region73
    $region72: #{tpu_custom_call.1} parent=1 // pred_region
      %s3162 = ssub.s32 128, 128
      %3163 = vsyncadd [#allocation4], %s3162
      %s3165 = sshll.u32 [#allocation16], 4
      %s3166 = int_to_ptr.vmem [resolvable:$true] %s3165
      %3168 = dma.vmem_to_hbm [thread:$0]  %s3166, 128, %s9, [#allocation4]
    $region73: #{tpu_custom_call.1} parent=1 // pred_fallthru
      _
    // Predicated region
    $region74: #{tpu_custom_call.1} parent=1 // pred_check
      _
    $region75: #{tpu_custom_call.1} parent=1 // pred_check_branch
      %3170 = sbr.rel (0) target = $region77
    $region76: #{tpu_custom_call.1} parent=1 // pred_region
      %3171 = dma.done [#allocation4], 128
    $region77: #{tpu_custom_call.1} parent=1 // pred_fallthru
      _
    %3172 = vsyncpa [#allocation3], 1
    %3173 = vsyncpa [#allocation6], 1
    %3174 = vsyncpa [#allocation9], 1
    %3175 = vsyncpa [#allocation12], 1
    %3176 = vsyncpa [#allocation15], 1
    %3177 = vsyncpa [#allocation4], 1

</llo_original>
